<compile_context>
chip_gen: v6e
topology: v6e:2x2x1
jax: 0.10.0
libtpu: 0.0.40
codegen_flags: <defaults>
</compile_context>

<pallas_src>
import numpy as np

import jax
import jax.numpy as jnp
from jax.experimental import pallas as pl
from jax.experimental.pallas import tpu as pltpu


# ----------------------- host-side operand construction -----------------------

def _build_layer_operands(w_np, b_np, K, s, p, op, Ng, H, W):
    """Fold ConvTranspose2d(K, s, p, op) over a group of Ng images into dense
    matmul operands for the lane-dense layout (rows = (n, h), lanes = (w, c)).

        X      : (Ng*H, W*IC)
        y      = X @ M_cat                        -> (Ng*H, K*OW*OC)
        ystack = stack_kh( y[:, kh-block] )       -> (K*Ng*H, OW*OC)
        out    = S_cat @ ystack + brow            -> (Ng*OH, OW*OC)
    """
    IC, OC = int(w_np.shape[0]), int(w_np.shape[1])
    OH = (H - 1) * s - 2 * p + K + op
    OW = (W - 1) * s - 2 * p + K + op
    OWOC = OW * OC

    # M_cat: rows = iw*IC + ic, cols = kh*OW*OC + ow*OC + oc
    M = np.zeros((W * IC, K * OWOC), np.float32)
    for kh in range(K):
        for iw in range(W):
            for kw in range(K):
                ow = iw * s - p + kw
                if 0 <= ow < OW:
                    M[iw * IC:(iw + 1) * IC,
                      kh * OWOC + ow * OC: kh * OWOC + (ow + 1) * OC] = w_np[:, :, kh, kw]

    # S_cat: rows = n*OH + oh, cols = kh*Ng*H + n*H + ih  (0/1 row placement,
    # block-diagonal over the images of the group)
    S = np.zeros((Ng * OH, K * Ng * H), np.float32)
    for kh in range(K):
        for n in range(Ng):
            for ih in range(H):
                oh = ih * s - p + kh
                if 0 <= oh < OH:
                    S[n * OH + oh, kh * Ng * H + n * H + ih] = 1.0

    brow = np.tile(b_np.reshape(1, OC).astype(np.float32), (1, OW))  # lane = ow*OC + oc
    return M, S, brow, OH, OW


# ------------------------------- Pallas kernel ---------------------------------

def _make_fused_decoder_kernel(layer_meta, pack_last):
    """layer_meta: list of (K, OW*OC, act) per layer (static python)."""
    n_layers = len(layer_meta)

    def kernel(*refs):
        x_ref, o_ref = refs[0], refs[-1]
        ops = refs[1:-1]

        x = x_ref[...]                      # (Ng*H, W*IC), lane-dense
        i = 0
        for li, (K, OWOC, act) in enumerate(layer_meta):
            is_last = (li == n_layers - 1)
            if is_last and pack_last:
                M_ref, Se_ref, So_ref, b_ref = ops[i], ops[i + 1], ops[i + 2], ops[i + 3]
                i += 4
            else:
                M_ref, S_ref, b_ref = ops[i], ops[i + 1], ops[i + 2]
                i += 3

            # One wide MXU push covering all K taps of the column direction.
            y = jnp.dot(x, M_ref[...], preferred_element_type=jnp.float32)
            # Restack the K tap blocks from lanes to sublanes (static slices + concat).
            ystack = jnp.concatenate(
                [y[:, kh * OWOC:(kh + 1) * OWOC] for kh in range(K)], axis=0)

            if is_last and pack_last:
                # Lane-dense final block: even/odd output rows packed side by side.
                ev = jnp.dot(Se_ref[...], ystack, preferred_element_type=jnp.float32)
                od = jnp.dot(So_ref[...], ystack, preferred_element_type=jnp.float32)
                acc = jnp.concatenate([ev, od], axis=1) + b_ref[...]
            else:
                acc = jnp.dot(S_ref[...], ystack, preferred_element_type=jnp.float32) + b_ref[...]

            if act == "relu":
                acc = jnp.maximum(acc, 0.0)
            elif act == "sigmoid":
                acc = jax.nn.sigmoid(acc)
            # else: identity
            x = acc                          # next layer's input, same layout

        o_ref[...] = x.astype(o_ref.dtype)

    return kernel


# ----------------------------- Decoder wrapper ---------------------------------

def _detect_batch_groups():
    """2 groups on chips with 2 TensorCores per chip (v7x), else 1 (fold all rows)."""
    try:
        kind = jax.devices()[0].device_kind.lower()
    except Exception:
        return 1
    return 2 if ("v7" in kind or "7x" in kind) else 1


class PallasDecoder:
    """Mirror of the PyTorch Decoder: sequence of ConvTranspose2d + activation."""

    def __init__(self, num_layers, channels, kernels, strides, activations, key):
        assert len(channels) - 1 == len(kernels)
        assert len(strides) == len(kernels) and num_layers == len(strides)
        assert num_layers == len(activations)
        self.channels = channels
        self.kernels = kernels
        self.strides = strides
        self.activations = activations
        self.padding = 1            # Decoder_block defaults
        self.out_padding = 1
        self.weights = []
        self.biases = []
        for i in range(num_layers):
            key, kw, kb = jax.random.split(key, 3)
            ic, oc, k = channels[i], channels[i + 1], kernels[i]
            # PyTorch ConvTranspose2d weight layout: (in_channels, out_channels, kH, kW)
            w = 0.1 * jax.random.normal(kw, (ic, oc, k, k), jnp.float32)
            b = 0.1 * jax.random.normal(kb, (oc,), jnp.float32)
            self.weights.append(w)
            self.biases.append(b)
        self._groups_pref = _detect_batch_groups()
        self._cache = {}            # (N, H, W) -> (jitted forward, operands)

    def _get_forward(self, N, H, W):
        cache_key = (N, H, W)
        if cache_key in self._cache:
            return self._cache[cache_key]

        groups = self._groups_pref if (self._groups_pref > 0 and N % self._groups_pref == 0) else 1
        Ng = N // groups

        C0 = self.channels[0]
        OC_last = self.channels[-1]
        n_layers = len(self.kernels)

        layer_meta = []
        operands = []
        in_specs = [pl.BlockSpec((Ng * H, W * C0), lambda g: (g, 0))]

        h, w = H, W
        pack_last = False
        for li, (wt, bs, K, s, act) in enumerate(zip(self.weights, self.biases,
                                                     self.kernels, self.strides,
                                                     self.activations)):
            M, S, brow, oh, ow = _build_layer_operands(
                np.asarray(wt), np.asarray(bs), K, s,
                self.padding, self.out_padding, Ng, h, w)
            oc = int(wt.shape[1])
            owoc = ow * oc
            is_last = (li == n_layers - 1)

            if is_last and (owoc % 128 != 0) and ((Ng * oh) % 2 == 0):
                # Pack pairs of output rows into lanes for an unmasked, lane-dense store.
                pack_last = True
                Se = np.ascontiguousarray(S[0::2, :])
                So = np.ascontiguousarray(S[1::2, :])
                bpk = np.concatenate([brow, brow], axis=1)
                for a in (M, Se, So, bpk):
                    operands.append(jnp.asarray(a))
                    in_specs.append(pl.BlockSpec(a.shape, lambda g: (0, 0)))
            else:
                for a in (M, S, brow):
                    operands.append(jnp.asarray(a))
                    in_specs.append(pl.BlockSpec(a.shape, lambda g: (0, 0)))

            layer_meta.append((K, owoc, act))
            h, w = oh, ow

        OH_L, OW_L = h, w
        OWOC_L = OW_L * OC_last
        if pack_last:
            blk_rows, blk_cols = (Ng * OH_L) // 2, 2 * OWOC_L
        else:
            blk_rows, blk_cols = Ng * OH_L, OWOC_L
        out_rows = groups * blk_rows

        kernel = _make_fused_decoder_kernel(layer_meta, pack_last)
        pallas_fn = pl.pallas_call(
            kernel,
            out_shape=jax.ShapeDtypeStruct((out_rows, blk_cols), jnp.float32),
            grid=(groups,),
            in_specs=in_specs,
            out_specs=pl.BlockSpec((blk_rows, blk_cols), lambda g: (g, 0)),
            compiler_params=pltpu.CompilerParams(dimension_semantics=("parallel",)),
        )

        def forward(x_nchw, *ops):
            # NCHW -> lane-dense rows (N*H, W*C).  Single input-side transpose; the
            # output side is a pure (free) row-major reshape since row/lane order
            # already matches (n, oh, ow, oc).
            x2 = jnp.transpose(x_nchw, (0, 2, 3, 1)).reshape(N * H, W * C0)
            y = pallas_fn(x2, *ops)
            y = y.reshape(N, OH_L, OW_L, OC_last)
            return jnp.transpose(y, (0, 3, 1, 2))   # trivial when OC_last == 1

        entry = (jax.jit(forward), tuple(operands))
        self._cache[cache_key] = entry
        return entry

    def __call__(self, x_nchw):
        N, C, H, W = x_nchw.shape
        assert C == self.channels[0]
        fwd, operands = self._get_forward(N, H, W)
        return fwd(x_nchw, *operands)


# ----------------------------- numpy reference ---------------------------------

def _ref_convtranspose2d(x, w, b, stride, padding, out_padding, act):
    # x: (N, IC, H, W), w: (IC, OC, K, K), b: (OC,)
    N, IC, H, W = x.shape
    _, OC, K, _ = w.shape
    OH = (H - 1) * stride - 2 * padding + K + out_padding
    OW = (W - 1) * stride - 2 * padding + K + out_padding
    out = np.zeros((N, OC, OH, OW), np.float64) + b.reshape(1, OC, 1, 1)
    for ih in range(H):
        for iw in range(W):
            for kh in range(K):
                for kw in range(K):
                    oh = ih * stride - padding + kh
                    ow = iw * stride - padding + kw
                    if 0 <= oh < OH and 0 <= ow < OW:
                        out[:, :, oh, ow] += np.einsum(
                            "ni,io->no", x[:, :, ih, iw], w[:, :, kh, kw])
    if act == "relu":
        out = np.maximum(out, 0.0)
    elif act == "sigmoid":
        out = 1.0 / (1.0 + np.exp(-out))
    return out.astype(np.float32)


def _ref_decoder(x, dec):
    y = np.asarray(x, np.float64)
    for w, b, s, act in zip(dec.weights, dec.biases, dec.strides, dec.activations):
        y = _ref_convtranspose2d(y, np.asarray(w), np.asarray(b),
                                 s, dec.padding, dec.out_padding, act)
    return y


# ----------------------------- main --------------------------------------------

if __name__ == "__main__":
    key = jax.random.PRNGKey(0)
    k_params, k_x = jax.random.split(key)

    num_layers = 3
    channels = [8, 8, 4, 1]
    kernels = [3, 3, 3]
    strides = [2, 2, 2]
    activations = ["relu", "relu", "sigmoid"]

    dec = PallasDecoder(num_layers, channels, kernels, strides, activations, k_params)

    # input is NCHW, like the PyTorch module
    x = jax.random.normal(k_x, (2, 8, 8, 8), jnp.float32)

    y = dec(x)
    y = jax.block_until_ready(y)

    assert y.shape == (2, 1, 64, 64), y.shape

    y_ref = _ref_decoder(x, dec)
    np.testing.assert_allclose(np.asarray(y), y_ref, atol=1e-3, rtol=1e-3)

    print("KERNEL_OK")
</pallas_src>

<mosaic_0001>
module attributes {stable_mosaic.version = 11 : i64} {
  func.func @kernel(%arg0: i32, %arg1: memref<16x64xf32, #tpu.memory_space<vmem>>, %arg2: memref<64x384xf32, #tpu.memory_space<vmem>>, %arg3: memref<32x48xf32, #tpu.memory_space<vmem>>, %arg4: memref<1x128xf32, #tpu.memory_space<vmem>>, %arg5: memref<128x384xf32, #tpu.memory_space<vmem>>, %arg6: memref<64x96xf32, #tpu.memory_space<vmem>>, %arg7: memref<1x128xf32, #tpu.memory_space<vmem>>, %arg8: memref<128x192xf32, #tpu.memory_space<vmem>>, %arg9: memref<64x192xf32, #tpu.memory_space<vmem>>, %arg10: memref<64x192xf32, #tpu.memory_space<vmem>>, %arg11: memref<1x128xf32, #tpu.memory_space<vmem>>, %arg12: memref<64x128xf32, #tpu.memory_space<vmem>>) attributes {dimension_semantics = [#tpu.dimension_semantics<parallel>], iteration_bounds = array<i64: 1>, scalar_prefetch = 0 : i64, scratch_operands = 0 : i64, tpu.core_type = #tpu.core_type<tc>, window_params = [{transform_indices = @transform_0, window_bounds = array<i64: 16, 64>}, {pipeline_mode = #tpu.pipeline_mode<synchronous>, transform_indices = @transform_1, window_bounds = array<i64: 64, 384>}, {pipeline_mode = #tpu.pipeline_mode<synchronous>, transform_indices = @transform_2, window_bounds = array<i64: 32, 48>}, {pipeline_mode = #tpu.pipeline_mode<synchronous>, transform_indices = @transform_3, window_bounds = array<i64: 1, 128>}, {pipeline_mode = #tpu.pipeline_mode<synchronous>, transform_indices = @transform_4, window_bounds = array<i64: 128, 384>}, {pipeline_mode = #tpu.pipeline_mode<synchronous>, transform_indices = @transform_5, window_bounds = array<i64: 64, 96>}, {pipeline_mode = #tpu.pipeline_mode<synchronous>, transform_indices = @transform_6, window_bounds = array<i64: 1, 128>}, {pipeline_mode = #tpu.pipeline_mode<synchronous>, transform_indices = @transform_7, window_bounds = array<i64: 128, 192>}, {pipeline_mode = #tpu.pipeline_mode<synchronous>, transform_indices = @transform_8, window_bounds = array<i64: 64, 192>}, {pipeline_mode = #tpu.pipeline_mode<synchronous>, transform_indices = @transform_9, window_bounds = array<i64: 64, 192>}, {pipeline_mode = #tpu.pipeline_mode<synchronous>, transform_indices = @transform_10, window_bounds = array<i64: 1, 128>}, {transform_indices = @transform_11, window_bounds = array<i64: 64, 128>}]} {
    %c0 = arith.constant 0 : index
    %c0_0 = arith.constant 0 : index
    %0 = vector.load %arg1[%c0, %c0_0] : memref<16x64xf32, #tpu.memory_space<vmem>>, vector<16x64xf32>
    %c0_1 = arith.constant 0 : index
    %c0_2 = arith.constant 0 : index
    %1 = vector.load %arg2[%c0_1, %c0_2] : memref<64x384xf32, #tpu.memory_space<vmem>>, vector<64x384xf32>
    %cst = arith.constant dense<0.000000e+00> : vector<16x384xf32>
    %2 = tpu.matmul %0, %1, %cst {dimension_numbers = #tpu.dot_dimension_numbers<[1], [0], [0], [1], [0, 0, 1, 1], [], []>} : vector<16x64xf32>, vector<64x384xf32>, vector<16x384xf32> -> vector<16x384xf32>
    %3 = vector.extract_strided_slice %2 {offsets = [0, 0], sizes = [16, 128], strides = [1, 1]} : vector<16x384xf32> to vector<16x128xf32>
    %4 = vector.extract_strided_slice %2 {offsets = [0, 128], sizes = [16, 128], strides = [1, 1]} : vector<16x384xf32> to vector<16x128xf32>
    %5 = vector.extract_strided_slice %2 {offsets = [0, 256], sizes = [16, 128], strides = [1, 1]} : vector<16x384xf32> to vector<16x128xf32>
    %6 = tpu.concatenate %3, %4, %5 in 0 : vector<16x128xf32>, vector<16x128xf32>, vector<16x128xf32> -> vector<48x128xf32>
    %c0_3 = arith.constant 0 : index
    %c0_4 = arith.constant 0 : index
    %7 = vector.load %arg3[%c0_3, %c0_4] : memref<32x48xf32, #tpu.memory_space<vmem>>, vector<32x48xf32>
    %cst_5 = arith.constant dense<0.000000e+00> : vector<32x128xf32>
    %8 = tpu.matmul %7, %6, %cst_5 {dimension_numbers = #tpu.dot_dimension_numbers<[1], [0], [0], [1], [0, 0, 1, 1], [], []>} : vector<32x48xf32>, vector<48x128xf32>, vector<32x128xf32> -> vector<32x128xf32>
    %c0_6 = arith.constant 0 : index
    %c0_7 = arith.constant 0 : index
    %9 = vector.load %arg4[%c0_6, %c0_7] : memref<1x128xf32, #tpu.memory_space<vmem>>, vector<1x128xf32>
    %10 = vector.broadcast %9 : vector<1x128xf32> to vector<32x128xf32>
    %11 = arith.addf %8, %10 : vector<32x128xf32>
    %cst_8 = arith.constant 0.000000e+00 : f32
    %12 = vector.broadcast %cst_8 : f32 to vector<32x128xf32>
    %13 = arith.maximumf %11, %12 : vector<32x128xf32>
    %c0_9 = arith.constant 0 : index
    %c0_10 = arith.constant 0 : index
    %14 = vector.load %arg5[%c0_9, %c0_10] : memref<128x384xf32, #tpu.memory_space<vmem>>, vector<128x384xf32>
    %cst_11 = arith.constant dense<0.000000e+00> : vector<32x384xf32>
    %15 = tpu.matmul %13, %14, %cst_11 {dimension_numbers = #tpu.dot_dimension_numbers<[1], [0], [0], [1], [0, 0, 1, 1], [], []>} : vector<32x128xf32>, vector<128x384xf32>, vector<32x384xf32> -> vector<32x384xf32>
    %16 = vector.extract_strided_slice %15 {offsets = [0, 0], sizes = [32, 128], strides = [1, 1]} : vector<32x384xf32> to vector<32x128xf32>
    %17 = vector.extract_strided_slice %15 {offsets = [0, 128], sizes = [32, 128], strides = [1, 1]} : vector<32x384xf32> to vector<32x128xf32>
    %18 = vector.extract_strided_slice %15 {offsets = [0, 256], sizes = [32, 128], strides = [1, 1]} : vector<32x384xf32> to vector<32x128xf32>
    %19 = tpu.concatenate %16, %17, %18 in 0 : vector<32x128xf32>, vector<32x128xf32>, vector<32x128xf32> -> vector<96x128xf32>
    %c0_12 = arith.constant 0 : index
    %c0_13 = arith.constant 0 : index
    %20 = vector.load %arg6[%c0_12, %c0_13] : memref<64x96xf32, #tpu.memory_space<vmem>>, vector<64x96xf32>
    %cst_14 = arith.constant dense<0.000000e+00> : vector<64x128xf32>
    %21 = tpu.matmul %20, %19, %cst_14 {dimension_numbers = #tpu.dot_dimension_numbers<[1], [0], [0], [1], [0, 0, 1, 1], [], []>} : vector<64x96xf32>, vector<96x128xf32>, vector<64x128xf32> -> vector<64x128xf32>
    %c0_15 = arith.constant 0 : index
    %c0_16 = arith.constant 0 : index
    %22 = vector.load %arg7[%c0_15, %c0_16] : memref<1x128xf32, #tpu.memory_space<vmem>>, vector<1x128xf32>
    %23 = vector.broadcast %22 : vector<1x128xf32> to vector<64x128xf32>
    %24 = arith.addf %21, %23 : vector<64x128xf32>
    %cst_17 = arith.constant 0.000000e+00 : f32
    %25 = vector.broadcast %cst_17 : f32 to vector<64x128xf32>
    %26 = arith.maximumf %24, %25 : vector<64x128xf32>
    %c0_18 = arith.constant 0 : index
    %c0_19 = arith.constant 0 : index
    %27 = vector.load %arg8[%c0_18, %c0_19] : memref<128x192xf32, #tpu.memory_space<vmem>>, vector<128x192xf32>
    %cst_20 = arith.constant dense<0.000000e+00> : vector<64x192xf32>
    %28 = tpu.matmul %26, %27, %cst_20 {dimension_numbers = #tpu.dot_dimension_numbers<[1], [0], [0], [1], [0, 0, 1, 1], [], []>} : vector<64x128xf32>, vector<128x192xf32>, vector<64x192xf32> -> vector<64x192xf32>
    %29 = vector.extract_strided_slice %28 {offsets = [0, 0], sizes = [64, 64], strides = [1, 1]} : vector<64x192xf32> to vector<64x64xf32>
    %30 = vector.extract_strided_slice %28 {offsets = [0, 64], sizes = [64, 64], strides = [1, 1]} : vector<64x192xf32> to vector<64x64xf32>
    %31 = vector.extract_strided_slice %28 {offsets = [0, 128], sizes = [64, 64], strides = [1, 1]} : vector<64x192xf32> to vector<64x64xf32>
    %32 = tpu.concatenate %29, %30, %31 in 0 : vector<64x64xf32>, vector<64x64xf32>, vector<64x64xf32> -> vector<192x64xf32>
    %c0_21 = arith.constant 0 : index
    %c0_22 = arith.constant 0 : index
    %33 = vector.load %arg9[%c0_21, %c0_22] : memref<64x192xf32, #tpu.memory_space<vmem>>, vector<64x192xf32>
    %cst_23 = arith.constant dense<0.000000e+00> : vector<64x64xf32>
    %34 = tpu.matmul %33, %32, %cst_23 {dimension_numbers = #tpu.dot_dimension_numbers<[1], [0], [0], [1], [0, 0, 1, 1], [], []>} : vector<64x192xf32>, vector<192x64xf32>, vector<64x64xf32> -> vector<64x64xf32>
    %c0_24 = arith.constant 0 : index
    %c0_25 = arith.constant 0 : index
    %35 = vector.load %arg10[%c0_24, %c0_25] : memref<64x192xf32, #tpu.memory_space<vmem>>, vector<64x192xf32>
    %cst_26 = arith.constant dense<0.000000e+00> : vector<64x64xf32>
    %36 = tpu.matmul %35, %32, %cst_26 {dimension_numbers = #tpu.dot_dimension_numbers<[1], [0], [0], [1], [0, 0, 1, 1], [], []>} : vector<64x192xf32>, vector<192x64xf32>, vector<64x64xf32> -> vector<64x64xf32>
    %37 = tpu.concatenate %34, %36 in 1 : vector<64x64xf32>, vector<64x64xf32> -> vector<64x128xf32>
    %c0_27 = arith.constant 0 : index
    %c0_28 = arith.constant 0 : index
    %38 = vector.load %arg11[%c0_27, %c0_28] : memref<1x128xf32, #tpu.memory_space<vmem>>, vector<1x128xf32>
    %39 = vector.broadcast %38 : vector<1x128xf32> to vector<64x128xf32>
    %40 = arith.addf %37, %39 : vector<64x128xf32>
    %41 = arith.negf %40 : vector<64x128xf32>
    %42 = math.exp %41 : vector<64x128xf32>
    %cst_29 = arith.constant 1.000000e+00 : f32
    %43 = vector.broadcast %cst_29 : f32 to vector<64x128xf32>
    %44 = arith.addf %43, %42 : vector<64x128xf32>
    %45 = arith.divf %43, %44 : vector<64x128xf32>
    %c0_30 = arith.constant 0 : index
    %c0_31 = arith.constant 0 : index
    %46 = vector.load %arg12[%c0_30, %c0_31] : memref<64x128xf32, #tpu.memory_space<vmem>>, vector<64x128xf32>
    tpu.vector_store %arg12[%c0_30, %c0_31], %45 {strides = array<i32>} : memref<64x128xf32, #tpu.memory_space<vmem>>, vector<64x128xf32>,
    return
  }
  func.func @transform_0(%arg0: i32) -> (i32, i32) {
    %c0_i32 = arith.constant 0 : i32
    %c0_i32_0 = arith.constant 0 : i32
    return %arg0, %c0_i32 : i32, i32
  }
  func.func @transform_1(%arg0: i32) -> (i32, i32) {
    %c0_i32 = arith.constant 0 : i32
    %c0_i32_0 = arith.constant 0 : i32
    %c0_i32_1 = arith.constant 0 : i32
    return %c0_i32, %c0_i32_0 : i32, i32
  }
  func.func @transform_2(%arg0: i32) -> (i32, i32) {
    %c0_i32 = arith.constant 0 : i32
    %c0_i32_0 = arith.constant 0 : i32
    %c0_i32_1 = arith.constant 0 : i32
    return %c0_i32, %c0_i32_0 : i32, i32
  }
  func.func @transform_3(%arg0: i32) -> (i32, i32) {
    %c0_i32 = arith.constant 0 : i32
    %c0_i32_0 = arith.constant 0 : i32
    %c0_i32_1 = arith.constant 0 : i32
    return %c0_i32, %c0_i32_0 : i32, i32
  }
  func.func @transform_4(%arg0: i32) -> (i32, i32) {
    %c0_i32 = arith.constant 0 : i32
    %c0_i32_0 = arith.constant 0 : i32
    %c0_i32_1 = arith.constant 0 : i32
    return %c0_i32, %c0_i32_0 : i32, i32
  }
  func.func @transform_5(%arg0: i32) -> (i32, i32) {
    %c0_i32 = arith.constant 0 : i32
    %c0_i32_0 = arith.constant 0 : i32
    %c0_i32_1 = arith.constant 0 : i32
    return %c0_i32, %c0_i32_0 : i32, i32
  }
  func.func @transform_6(%arg0: i32) -> (i32, i32) {
    %c0_i32 = arith.constant 0 : i32
    %c0_i32_0 = arith.constant 0 : i32
    %c0_i32_1 = arith.constant 0 : i32
    return %c0_i32, %c0_i32_0 : i32, i32
  }
  func.func @transform_7(%arg0: i32) -> (i32, i32) {
    %c0_i32 = arith.constant 0 : i32
    %c0_i32_0 = arith.constant 0 : i32
    %c0_i32_1 = arith.constant 0 : i32
    return %c0_i32, %c0_i32_0 : i32, i32
  }
  func.func @transform_8(%arg0: i32) -> (i32, i32) {
    %c0_i32 = arith.constant 0 : i32
    %c0_i32_0 = arith.constant 0 : i32
    %c0_i32_1 = arith.constant 0 : i32
    return %c0_i32, %c0_i32_0 : i32, i32
  }
  func.func @transform_9(%arg0: i32) -> (i32, i32) {
    %c0_i32 = arith.constant 0 : i32
    %c0_i32_0 = arith.constant 0 : i32
    %c0_i32_1 = arith.constant 0 : i32
    return %c0_i32, %c0_i32_0 : i32, i32
  }
  func.func @transform_10(%arg0: i32) -> (i32, i32) {
    %c0_i32 = arith.constant 0 : i32
    %c0_i32_0 = arith.constant 0 : i32
    %c0_i32_1 = arith.constant 0 : i32
    return %c0_i32, %c0_i32_0 : i32, i32
  }
  func.func @transform_11(%arg0: i32) -> (i32, i32) {
    %c0_i32 = arith.constant 0 : i32
    %c0_i32_0 = arith.constant 0 : i32
    return %arg0, %c0_i32 : i32, i32
  }
}

</mosaic_0001>

<llo_original>
// kernel: forward.1
$region0: #{forward.1}
  #allocation0 [shape = 'u32[]', space=smem, size = 0x4, offset = 0x4, fixed_abs, tag = 'smem constant byte address 0x4 - core index']
  #allocation1 [shape = 'u32[144,128]{1,0:T(1,128)}', space=vmem, size = 0x12000, scoped, tag = 'internal scratch']
  %s0 = inlined_call_operand.vmem [shape: f32[16,64], index: 0, kind: input, shape index: {}]
  %s1 = inlined_call_operand.vmem [shape: f32[64,384], index: 1, kind: input, shape index: {}]
  %s2 = inlined_call_operand.hbm [shape: f32[32,48], index: 2, kind: input, shape index: {}]
  %s3 = inlined_call_operand.vmem [shape: f32[1,128], index: 3, kind: input, shape index: {}]
  %s4 = inlined_call_operand.vmem [shape: f32[128,384], index: 4, kind: input, shape index: {}]
  %s5 = inlined_call_operand.vmem [shape: f32[64,96], index: 5, kind: input, shape index: {}]
  %s6 = inlined_call_operand.vmem [shape: f32[1,128], index: 6, kind: input, shape index: {}]
  %s7 = inlined_call_operand.vmem [shape: f32[128,192], index: 7, kind: input, shape index: {}]
  %s8 = inlined_call_operand.hbm [shape: f32[64,192], index: 8, kind: input, shape index: {}]
  %s9 = inlined_call_operand.hbm [shape: f32[64,192], index: 9, kind: input, shape index: {}]
  %s10 = inlined_call_operand.vmem [shape: f32[1,128], index: 10, kind: input, shape index: {}]
  %s11 = inlined_call_operand.vmem [shape: f32[64,128], index: 11, kind: output, shape index: {}]
  %s12 = sld [smem:[#allocation0]]
  $region66: #{forward.1} parent=0
    _
  %s14 = ssub.s32 1, %s12
  %s15 = scalar_select 0, %s14, %s12
  $region1: #{forward.1} parent=0
    #allocation2 [shape = 'u8[16384]{0}', space=vmem, size = 0x4000, scoped, tag = 'input window, operand 2, single buffered']
    #allocation3 [shape = 's32[1]{0}', space=sflag, size = 0x4, scoped, tag = 'scoped memory for forward.1']
    #allocation4 [shape = 'u8[65536]{0}', space=vmem, size = 0x10000, scoped, tag = 'input window, operand 8, single buffered']
    #allocation5 [shape = 's32[1]{0}', space=sflag, size = 0x4, scoped, tag = 'scoped memory for forward.1']
    #allocation6 [shape = 'u8[65536]{0}', space=vmem, size = 0x10000, scoped, tag = 'input window, operand 9, single buffered']
    %16 = vsyncpa [#allocation3], 0
    %17 = vsyncpa [#allocation5], 0
    // Predicated region
    $region2: #{forward.1} parent=1 // pred_check
      _
    $region3: #{forward.1} parent=1 // pred_check_branch
      %19 = sbr.rel (0) target = $region5
    $region4: #{forward.1} parent=1 // pred_region
      _
    $region5: #{forward.1} parent=1 // pred_fallthru
      _
    // Predicated region
    $region6: #{forward.1} parent=1 // pred_check
      _
    $region7: #{forward.1} parent=1 // pred_check_branch
      %21 = sbr.rel (0) target = $region9
    $region8: #{forward.1} parent=1 // pred_region
      _
    $region9: #{forward.1} parent=1 // pred_fallthru
      _
    // Predicated region
    $region10: #{forward.1} parent=1 // pred_check
      _
    $region11: #{forward.1} parent=1 // pred_check_branch
      %23 = sbr.rel (0) target = $region13
    $region12: #{forward.1} parent=1 // pred_region
      %s25 = ssub.s32 512, 512
      %26 = vsyncadd [#allocation3], %s25
      %s27 = sshll.u32 [#allocation2], 4
      %s28 = int_to_ptr.vmem [resolvable:$true] %s27
      %33 = dma.hbm_to_vmem [thread:$0]  %s2, 512, %s28, [#allocation3], 128, 128, 8
    $region13: #{forward.1} parent=1 // pred_fallthru
      _
    // Predicated region
    $region14: #{forward.1} parent=1 // pred_check
      _
    $region15: #{forward.1} parent=1 // pred_check_branch
      %35 = sbr.rel (0) target = $region17
    $region16: #{forward.1} parent=1 // pred_region
      _
    $region17: #{forward.1} parent=1 // pred_fallthru
      _
    // Predicated region
    $region18: #{forward.1} parent=1 // pred_check
      _
    $region19: #{forward.1} parent=1 // pred_check_branch
      %37 = sbr.rel (0) target = $region21
    $region20: #{forward.1} parent=1 // pred_region
      _
    $region21: #{forward.1} parent=1 // pred_fallthru
      _
    // Predicated region
    $region22: #{forward.1} parent=1 // pred_check
      _
    $region23: #{forward.1} parent=1 // pred_check_branch
      %39 = sbr.rel (0) target = $region25
    $region24: #{forward.1} parent=1 // pred_region
      _
    $region25: #{forward.1} parent=1 // pred_fallthru
      _
    // Predicated region
    $region26: #{forward.1} parent=1 // pred_check
      _
    $region27: #{forward.1} parent=1 // pred_check_branch
      %41 = sbr.rel (0) target = $region29
    $region28: #{forward.1} parent=1 // pred_region
      _
    $region29: #{forward.1} parent=1 // pred_fallthru
      _
    // Predicated region
    $region30: #{forward.1} parent=1 // pred_check
      _
    $region31: #{forward.1} parent=1 // pred_check_branch
      %43 = sbr.rel (0) target = $region33
    $region32: #{forward.1} parent=1 // pred_region
      _
    $region33: #{forward.1} parent=1 // pred_fallthru
      _
    // Predicated region
    $region34: #{forward.1} parent=1 // pred_check
      _
    $region35: #{forward.1} parent=1 // pred_check_branch
      %45 = sbr.rel (0) target = $region37
    $region36: #{forward.1} parent=1 // pred_region
      %s47 = ssub.s32 2048, 2048
      %48 = vsyncadd [#allocation5], %s47
      %s49 = sshll.u32 [#allocation4], 4
      %s50 = int_to_ptr.vmem [resolvable:$true] %s49
      %55 = dma.hbm_to_vmem [thread:$0]  %s8, 2048, %s50, [#allocation5], 256, 256, 16
    $region37: #{forward.1} parent=1 // pred_fallthru
      _
    // Predicated region
    $region38: #{forward.1} parent=1 // pred_check
      _
    $region39: #{forward.1} parent=1 // pred_check_branch
      %57 = sbr.rel (0) target = $region41
    $region40: #{forward.1} parent=1 // pred_region
      %s59 = ssub.s32 2048, 2048
      %60 = vsyncadd [#allocation5], %s59
      %s61 = sshll.u32 [#allocation6], 4
      %s62 = int_to_ptr.vmem [resolvable:$true] %s61
      %67 = dma.hbm_to_vmem [thread:$0]  %s9, 2048, %s62, [#allocation5], 256, 256, 16
    $region41: #{forward.1} parent=1 // pred_fallthru
      _
    // Predicated region
    $region42: #{forward.1} parent=1 // pred_check
      _
    $region43: #{forward.1} parent=1 // pred_check_branch
      %69 = sbr.rel (0) target = $region45
    $region44: #{forward.1} parent=1 // pred_region
      _
    $region45: #{forward.1} parent=1 // pred_fallthru
      _
    // Predicated region
    $region46: #{forward.1} parent=1 // pred_check
      _
    $region47: #{forward.1} parent=1 // pred_check_branch
      %71 = sbr.rel (0) target = $region49
    $region48: #{forward.1} parent=1 // pred_region
      %72 = dma.done [#allocation3], 512
    $region49: #{forward.1} parent=1 // pred_fallthru
      _
    // Predicated region
    $region50: #{forward.1} parent=1 // pred_check
      _
    $region51: #{forward.1} parent=1 // pred_check_branch
      %74 = sbr.rel (0) target = $region53
    $region52: #{forward.1} parent=1 // pred_region
      %75 = dma.done [#allocation5], 2048
    $region53: #{forward.1} parent=1 // pred_fallthru
      _
    // Predicated region
    $region54: #{forward.1} parent=1 // pred_check
      _
    $region55: #{forward.1} parent=1 // pred_check_branch
      %77 = sbr.rel (0) target = $region57
    $region56: #{forward.1} parent=1 // pred_region
      %78 = dma.done [#allocation5], 2048
    $region57: #{forward.1} parent=1 // pred_fallthru
      _
    %v79 = vld [vmem:[%s0] sm:$0xff]
    %v80 = vld [vmem:[%s0 + $0x8] sm:$0xff]
    %v81 = vld [vmem:[%s1] sm:$0xff]
    %v82 = vld [vmem:[%s1 + $0x8] sm:$0xff]
    %v83 = vld [vmem:[%s1 + $0x10] sm:$0xff]
    %v84 = vld [vmem:[%s1 + $0x18] sm:$0xff]
    %v85 = vld [vmem:[%s1 + $0x20] sm:$0xff]
    %v86 = vld [vmem:[%s1 + $0x28] sm:$0xff]
    %v87 = vld [vmem:[%s1 + $0x30] sm:$0xff]
    %v88 = vld [vmem:[%s1 + $0x38] sm:$0xff]
    %v89 = vld [vmem:[%s1 + $0x40] sm:$0xff]
    %v90 = vld [vmem:[%s1 + $0x48] sm:$0xff]
    %v91 = vld [vmem:[%s1 + $0x50] sm:$0xff]
    %v92 = vld [vmem:[%s1 + $0x58] sm:$0xff]
    %v93 = vld [vmem:[%s1 + $0x60] sm:$0xff]
    %v94 = vld [vmem:[%s1 + $0x68] sm:$0xff]
    %v95 = vld [vmem:[%s1 + $0x70] sm:$0xff]
    %v96 = vld [vmem:[%s1 + $0x78] sm:$0xff]
    %v97 = vld [vmem:[%s1 + $0x80] sm:$0xff]
    %v98 = vld [vmem:[%s1 + $0x88] sm:$0xff]
    %v99 = vld [vmem:[%s1 + $0x90] sm:$0xff]
    %v100 = vld [vmem:[%s1 + $0x98] sm:$0xff]
    %v101 = vld [vmem:[%s1 + $0xa0] sm:$0xff]
    %v102 = vld [vmem:[%s1 + $0xa8] sm:$0xff]
    %v103 = vld [vmem:[%s1 + $0xb0] sm:$0xff]
    %v104 = vld [vmem:[%s1 + $0xb8] sm:$0xff]
    %vm105 = vcmask 523264
    %v107 = vsel %vm105, %v79, 0
    %v110 = vsel %vm105, %v80, 0
    %112 = vmatprep.subr.mxu0 0.0
    %113 = vmatpush1.msra.mxu0 0.0
    %114 = vmatprep.subr.mxu0 0.0
    %115 = vmatpush1.msra.mxu0 0.0
    %116 = vmatprep.subr.mxu0 0.0
    %117 = vmatpush1.msra.mxu0 0.0
    %118 = vmatprep.subr.mxu0 0.0
    %119 = vmatpush1.msra.mxu0 0.0
    %120 = vmatprep.subr.mxu0 0.0
    %121 = vmatpush1.msra.mxu0 0.0
    %122 = vmatprep.subr.mxu0 0.0
    %123 = vmatpush1.msra.mxu0 0.0
    %124 = vmatprep.subr.mxu0 0.0
    %125 = vmatpush1.msra.mxu0 0.0
    %126 = vmatprep.subr.mxu0 0.0
    %127 = vmatpush1.msra.mxu0 0.0
    %128 = vmatprep.subr.mxu0 %v103
    %129 = vmatpush1.msra.mxu0 %v102
    %130 = vmatprep.subr.mxu0 %v100
    %131 = vmatpush1.msra.mxu0 %v99
    %132 = vmatprep.subr.mxu0 %v97
    %133 = vmatpush1.msra.mxu0 %v96
    %134 = vmatprep.subr.mxu0 %v94
    %135 = vmatpush1.msra.mxu0 %v93
    %136 = vmatprep.subr.mxu0 %v91
    %137 = vmatpush1.msra.mxu0 %v90
    %138 = vmatprep.subr.mxu0 %v88
    %139 = vmatpush1.msra.mxu0 %v87
    %140 = vmatprep.subr.mxu0 %v85
    %141 = vmatpush1.msra.mxu0 %v84
    %142 = vmatprep.subr.mxu0 %v82
    %143 = vmatpush1.msra.mxu0 %v81
    %144 = vmatprep.subr.mxu0 0.0
    %145 = vmatpush2.msra.mxu0 0.0
    %146 = vmatprep.subr.mxu0 0.0
    %147 = vmatpush2.msra.mxu0 0.0
    %148 = vmatprep.subr.mxu0 0.0
    %149 = vmatpush2.msra.mxu0 0.0
    %150 = vmatprep.subr.mxu0 0.0
    %151 = vmatpush2.msra.mxu0 0.0
    %152 = vmatprep.subr.mxu0 0.0
    %153 = vmatpush2.msra.mxu0 0.0
    %154 = vmatprep.subr.mxu0 0.0
    %155 = vmatpush2.msra.mxu0 0.0
    %156 = vmatprep.subr.mxu0 0.0
    %157 = vmatpush2.msra.mxu0 0.0
    %158 = vmatprep.subr.mxu0 0.0
    %159 = vmatpush2.msra.mxu0 0.0
    %160 = vmatprep.subr.mxu0 0.0
    %161 = vmatpush2.msra.mxu0 0.0
    %162 = vmatprep.subr.mxu0 0.0
    %163 = vmatpush2.msra.mxu0 0.0
    %164 = vmatprep.subr.mxu0 0.0
    %165 = vmatpush2.msra.mxu0 0.0
    %166 = vmatprep.subr.mxu0 0.0
    %167 = vmatpush2.msra.mxu0 0.0
    %168 = vmatprep.subr.mxu0 0.0
    %169 = vmatpush2.msra.mxu0 0.0
    %170 = vmatprep.subr.mxu0 0.0
    %171 = vmatpush2.msra.mxu0 0.0
    %172 = vmatprep.subr.mxu0 0.0
    %173 = vmatpush2.msra.mxu0 0.0
    %174 = vmatprep.subr.mxu0 0.0
    %175 = vmatpush2.msra.mxu0 0.0
    %176 = vmatprep.mubr.f32.mxu0 0.0
    %177 = vmatmul.mubr.f32.gmra.mxu0 %v107
    %v178 = vpop.f32.mrf.mxu0
    %v179 = vadd.f32 0.0, %v178
    %v180 = vpop.f32.mrf.mxu0
    %v181 = vadd.f32 0.0, %v180
    %182 = vmatprep.mubr.f32.mxu0 0.0
    %183 = vmatmul.mubr.f32.gmra.mxu0 %v110
    %v184 = vpop.f32.mrf.mxu0
    %v185 = vadd.f32 0.0, %v184
    %v186 = vpop.f32.mrf.mxu0
    %v187 = vadd.f32 0.0, %v186
    %188 = vdwg.mxu0
    %189 = vmatprep.subr.mxu0 0.0
    %190 = vmatpush1.msra.mxu0 0.0
    %191 = vmatprep.subr.mxu0 0.0
    %192 = vmatpush1.msra.mxu0 0.0
    %193 = vmatprep.subr.mxu0 0.0
    %194 = vmatpush1.msra.mxu0 0.0
    %195 = vmatprep.subr.mxu0 0.0
    %196 = vmatpush1.msra.mxu0 0.0
    %197 = vmatprep.subr.mxu0 0.0
    %198 = vmatpush1.msra.mxu0 0.0
    %199 = vmatprep.subr.mxu0 0.0
    %200 = vmatpush1.msra.mxu0 0.0
    %201 = vmatprep.subr.mxu0 0.0
    %202 = vmatpush1.msra.mxu0 0.0
    %203 = vmatprep.subr.mxu0 0.0
    %204 = vmatpush1.msra.mxu0 0.0
    %205 = vmatprep.subr.mxu0 0.0
    %206 = vmatpush1.msra.mxu0 %v104
    %207 = vmatprep.subr.mxu0 0.0
    %208 = vmatpush1.msra.mxu0 %v101
    %209 = vmatprep.subr.mxu0 0.0
    %210 = vmatpush1.msra.mxu0 %v98
    %211 = vmatprep.subr.mxu0 0.0
    %212 = vmatpush1.msra.mxu0 %v95
    %213 = vmatprep.subr.mxu0 0.0
    %214 = vmatpush1.msra.mxu0 %v92
    %215 = vmatprep.subr.mxu0 0.0
    %216 = vmatpush1.msra.mxu0 %v89
    %217 = vmatprep.subr.mxu0 0.0
    %218 = vmatpush1.msra.mxu0 %v86
    %219 = vmatprep.subr.mxu0 0.0
    %220 = vmatpush1.msra.mxu0 %v83
    %221 = vmatprep.subr.mxu0 0.0
    %222 = vmatpush2.msra.mxu0 0.0
    %223 = vmatprep.subr.mxu0 0.0
    %224 = vmatpush2.msra.mxu0 0.0
    %225 = vmatprep.subr.mxu0 0.0
    %226 = vmatpush2.msra.mxu0 0.0
    %227 = vmatprep.subr.mxu0 0.0
    %228 = vmatpush2.msra.mxu0 0.0
    %229 = vmatprep.subr.mxu0 0.0
    %230 = vmatpush2.msra.mxu0 0.0
    %231 = vmatprep.subr.mxu0 0.0
    %232 = vmatpush2.msra.mxu0 0.0
    %233 = vmatprep.subr.mxu0 0.0
    %234 = vmatpush2.msra.mxu0 0.0
    %235 = vmatprep.subr.mxu0 0.0
    %236 = vmatpush2.msra.mxu0 0.0
    %237 = vmatprep.subr.mxu0 0.0
    %238 = vmatpush2.msra.mxu0 0.0
    %239 = vmatprep.subr.mxu0 0.0
    %240 = vmatpush2.msra.mxu0 0.0
    %241 = vmatprep.subr.mxu0 0.0
    %242 = vmatpush2.msra.mxu0 0.0
    %243 = vmatprep.subr.mxu0 0.0
    %244 = vmatpush2.msra.mxu0 0.0
    %245 = vmatprep.subr.mxu0 0.0
    %246 = vmatpush2.msra.mxu0 0.0
    %247 = vmatprep.subr.mxu0 0.0
    %248 = vmatpush2.msra.mxu0 0.0
    %249 = vmatprep.subr.mxu0 0.0
    %250 = vmatpush2.msra.mxu0 0.0
    %251 = vmatprep.subr.mxu0 0.0
    %252 = vmatpush2.msra.mxu0 0.0
    %253 = vmatprep.mubr.f32.mxu0 0.0
    %254 = vmatmul.mubr.f32.gmra.mxu0 %v107
    %v255 = vpop.f32.mrf.mxu0
    %v256 = vadd.f32 0.0, %v255
    %v257 = vpop.f32.mrf.mxu0
    %258 = vmatprep.mubr.f32.mxu0 0.0
    %259 = vmatmul.mubr.f32.gmra.mxu0 %v110
    %v260 = vpop.f32.mrf.mxu0
    %v261 = vadd.f32 0.0, %v260
    %v262 = vpop.f32.mrf.mxu0
    %263 = vdwg.mxu0
    %v264 = vld [vmem:[#allocation2] sm:$0xff]
    %v265 = vld [vmem:[#allocation2 + $0x8] sm:$0xff]
    %v266 = vld [vmem:[#allocation2 + $0x10] sm:$0xff]
    %v267 = vld [vmem:[#allocation2 + $0x18] sm:$0xff]
    %v268 = vld [vmem:[%s3] sm:$0x1]
    %v270 = vlaneseq
    %v271 = vshrl.u32 %v270, 7
    %v272 = vsub.s32 0, %v271
    %v273 = vrot.slane %v268, %v272
    %vm275 = vcmask 392192
    %v277 = vsel %vm275, %v264, 0
    %v280 = vsel %vm275, %v265, 0
    %v283 = vsel %vm275, %v266, 0
    %v286 = vsel %vm275, %v267, 0
    %288 = vmatprep.subr.mxu0 0.0
    %289 = vmatpush1.msra.mxu0 0.0
    %290 = vmatprep.subr.mxu0 0.0
    %291 = vmatpush1.msra.mxu0 0.0
    %292 = vmatprep.subr.mxu0 0.0
    %293 = vmatpush1.msra.mxu0 0.0
    %294 = vmatprep.subr.mxu0 0.0
    %295 = vmatpush1.msra.mxu0 0.0
    %296 = vmatprep.subr.mxu0 0.0
    %297 = vmatpush1.msra.mxu0 0.0
    %298 = vmatprep.subr.mxu0 0.0
    %299 = vmatpush1.msra.mxu0 0.0
    %300 = vmatprep.subr.mxu0 0.0
    %301 = vmatpush1.msra.mxu0 0.0
    %302 = vmatprep.subr.mxu0 0.0
    %303 = vmatpush1.msra.mxu0 0.0
    %304 = vmatprep.subr.mxu0 0.0
    %305 = vmatpush1.msra.mxu0 0.0
    %306 = vmatprep.subr.mxu0 0.0
    %307 = vmatpush1.msra.mxu0 0.0
    %308 = vmatprep.subr.mxu0 0.0
    %309 = vmatpush1.msra.mxu0 %v261
    %310 = vmatprep.subr.mxu0 0.0
    %311 = vmatpush1.msra.mxu0 %v256
    %312 = vmatprep.subr.mxu0 0.0
    %313 = vmatpush1.msra.mxu0 %v187
    %314 = vmatprep.subr.mxu0 0.0
    %315 = vmatpush1.msra.mxu0 %v181
    %316 = vmatprep.subr.mxu0 0.0
    %317 = vmatpush1.msra.mxu0 %v185
    %318 = vmatprep.subr.mxu0 0.0
    %319 = vmatpush1.msra.mxu0 %v179
    %320 = vmatprep.subr.mxu0 0.0
    %321 = vmatpush2.msra.mxu0 0.0
    %322 = vmatprep.subr.mxu0 0.0
    %323 = vmatpush2.msra.mxu0 0.0
    %324 = vmatprep.subr.mxu0 0.0
    %325 = vmatpush2.msra.mxu0 0.0
    %326 = vmatprep.subr.mxu0 0.0
    %327 = vmatpush2.msra.mxu0 0.0
    %328 = vmatprep.subr.mxu0 0.0
    %329 = vmatpush2.msra.mxu0 0.0
    %330 = vmatprep.subr.mxu0 0.0
    %331 = vmatpush2.msra.mxu0 0.0
    %332 = vmatprep.subr.mxu0 0.0
    %333 = vmatpush2.msra.mxu0 0.0
    %334 = vmatprep.subr.mxu0 0.0
    %335 = vmatpush2.msra.mxu0 0.0
    %336 = vmatprep.subr.mxu0 0.0
    %337 = vmatpush2.msra.mxu0 0.0
    %338 = vmatprep.subr.mxu0 0.0
    %339 = vmatpush2.msra.mxu0 0.0
    %340 = vmatprep.subr.mxu0 0.0
    %341 = vmatpush2.msra.mxu0 0.0
    %342 = vmatprep.subr.mxu0 0.0
    %343 = vmatpush2.msra.mxu0 0.0
    %344 = vmatprep.subr.mxu0 0.0
    %345 = vmatpush2.msra.mxu0 0.0
    %346 = vmatprep.subr.mxu0 0.0
    %347 = vmatpush2.msra.mxu0 0.0
    %348 = vmatprep.subr.mxu0 0.0
    %349 = vmatpush2.msra.mxu0 0.0
    %350 = vmatprep.subr.mxu0 0.0
    %351 = vmatpush2.msra.mxu0 0.0
    %352 = vmatprep.mubr.f32.mxu0 0.0
    %353 = vmatmul.mubr.f32.gmra.mxu0 %v277
    %v354 = vpop.f32.mrf.mxu0
    %v355 = vadd.f32 %v273, %v354
    %v356 = vpop.f32.mrf.mxu0
    %357 = vmatprep.mubr.f32.mxu0 0.0
    %358 = vmatmul.mubr.f32.gmra.mxu0 %v280
    %v359 = vpop.f32.mrf.mxu0
    %v360 = vadd.f32 %v273, %v359
    %v361 = vpop.f32.mrf.mxu0
    %362 = vmatprep.mubr.f32.mxu0 0.0
    %363 = vmatmul.mubr.f32.gmra.mxu0 %v283
    %v364 = vpop.f32.mrf.mxu0
    %v365 = vadd.f32 %v273, %v364
    %v366 = vpop.f32.mrf.mxu0
    %367 = vmatprep.mubr.f32.mxu0 0.0
    %368 = vmatmul.mubr.f32.gmra.mxu0 %v286
    %v369 = vpop.f32.mrf.mxu0
    %v370 = vadd.f32 %v273, %v369
    %v371 = vpop.f32.mrf.mxu0
    %372 = vdwg.mxu0
    %v373 = vmax.f32 %v355, 0.0
    %v374 = vmax.f32 %v360, 0.0
    %v375 = vmax.f32 %v365, 0.0
    %v376 = vmax.f32 %v370, 0.0
    %v377 = vld [vmem:[%s4] sm:$0xff]
    %v378 = vld [vmem:[%s4 + $0x8] sm:$0xff]
    %v379 = vld [vmem:[%s4 + $0x10] sm:$0xff]
    %v380 = vld [vmem:[%s4 + $0x18] sm:$0xff]
    %v381 = vld [vmem:[%s4 + $0x20] sm:$0xff]
    %v382 = vld [vmem:[%s4 + $0x28] sm:$0xff]
    %v383 = vld [vmem:[%s4 + $0x30] sm:$0xff]
    %v384 = vld [vmem:[%s4 + $0x38] sm:$0xff]
    %v385 = vld [vmem:[%s4 + $0x40] sm:$0xff]
    %v386 = vld [vmem:[%s4 + $0x48] sm:$0xff]
    %v387 = vld [vmem:[%s4 + $0x50] sm:$0xff]
    %v388 = vld [vmem:[%s4 + $0x58] sm:$0xff]
    %v389 = vld [vmem:[%s4 + $0x60] sm:$0xff]
    %v390 = vld [vmem:[%s4 + $0x68] sm:$0xff]
    %v391 = vld [vmem:[%s4 + $0x70] sm:$0xff]
    %v392 = vld [vmem:[%s4 + $0x78] sm:$0xff]
    %v393 = vld [vmem:[%s4 + $0x80] sm:$0xff]
    %v394 = vld [vmem:[%s4 + $0x88] sm:$0xff]
    %v395 = vld [vmem:[%s4 + $0x90] sm:$0xff]
    %v396 = vld [vmem:[%s4 + $0x98] sm:$0xff]
    %v397 = vld [vmem:[%s4 + $0xa0] sm:$0xff]
    %v398 = vld [vmem:[%s4 + $0xa8] sm:$0xff]
    %v399 = vld [vmem:[%s4 + $0xb0] sm:$0xff]
    %v400 = vld [vmem:[%s4 + $0xb8] sm:$0xff]
    %v401 = vld [vmem:[%s4 + $0xc0] sm:$0xff]
    %v402 = vld [vmem:[%s4 + $0xc8] sm:$0xff]
    %v403 = vld [vmem:[%s4 + $0xd0] sm:$0xff]
    %v404 = vld [vmem:[%s4 + $0xd8] sm:$0xff]
    %v405 = vld [vmem:[%s4 + $0xe0] sm:$0xff]
    %v406 = vld [vmem:[%s4 + $0xe8] sm:$0xff]
    %v407 = vld [vmem:[%s4 + $0xf0] sm:$0xff]
    %v408 = vld [vmem:[%s4 + $0xf8] sm:$0xff]
    %v409 = vld [vmem:[%s4 + $0x100] sm:$0xff]
    %v410 = vld [vmem:[%s4 + $0x108] sm:$0xff]
    %v411 = vld [vmem:[%s4 + $0x110] sm:$0xff]
    %v412 = vld [vmem:[%s4 + $0x118] sm:$0xff]
    %v413 = vld [vmem:[%s4 + $0x120] sm:$0xff]
    %v414 = vld [vmem:[%s4 + $0x128] sm:$0xff]
    %v415 = vld [vmem:[%s4 + $0x130] sm:$0xff]
    %v416 = vld [vmem:[%s4 + $0x138] sm:$0xff]
    %v417 = vld [vmem:[%s4 + $0x140] sm:$0xff]
    %v418 = vld [vmem:[%s4 + $0x148] sm:$0xff]
    %v419 = vld [vmem:[%s4 + $0x150] sm:$0xff]
    %v420 = vld [vmem:[%s4 + $0x158] sm:$0xff]
    %v421 = vld [vmem:[%s4 + $0x160] sm:$0xff]
    %v422 = vld [vmem:[%s4 + $0x168] sm:$0xff]
    %v423 = vld [vmem:[%s4 + $0x170] sm:$0xff]
    %v424 = vld [vmem:[%s4 + $0x178] sm:$0xff]
    %425 = vmatprep.subr.mxu0 %v423
    %426 = vmatpush1.msra.mxu0 %v422
    %427 = vmatprep.subr.mxu0 %v420
    %428 = vmatpush1.msra.mxu0 %v419
    %429 = vmatprep.subr.mxu0 %v417
    %430 = vmatpush1.msra.mxu0 %v416
    %431 = vmatprep.subr.mxu0 %v414
    %432 = vmatpush1.msra.mxu0 %v413
    %433 = vmatprep.subr.mxu0 %v411
    %434 = vmatpush1.msra.mxu0 %v410
    %435 = vmatprep.subr.mxu0 %v408
    %436 = vmatpush1.msra.mxu0 %v407
    %437 = vmatprep.subr.mxu0 %v405
    %438 = vmatpush1.msra.mxu0 %v404
    %439 = vmatprep.subr.mxu0 %v402
    %440 = vmatpush1.msra.mxu0 %v401
    %441 = vmatprep.subr.mxu0 %v399
    %442 = vmatpush1.msra.mxu0 %v398
    %443 = vmatprep.subr.mxu0 %v396
    %444 = vmatpush1.msra.mxu0 %v395
    %445 = vmatprep.subr.mxu0 %v393
    %446 = vmatpush1.msra.mxu0 %v392
    %447 = vmatprep.subr.mxu0 %v390
    %448 = vmatpush1.msra.mxu0 %v389
    %449 = vmatprep.subr.mxu0 %v387
    %450 = vmatpush1.msra.mxu0 %v386
    %451 = vmatprep.subr.mxu0 %v384
    %452 = vmatpush1.msra.mxu0 %v383
    %453 = vmatprep.subr.mxu0 %v381
    %454 = vmatpush1.msra.mxu0 %v380
    %455 = vmatprep.subr.mxu0 %v378
    %456 = vmatpush1.msra.mxu0 %v377
    %457 = vmatprep.subr.mxu0 0.0
    %458 = vmatpush2.msra.mxu0 0.0
    %459 = vmatprep.subr.mxu0 0.0
    %460 = vmatpush2.msra.mxu0 0.0
    %461 = vmatprep.subr.mxu0 0.0
    %462 = vmatpush2.msra.mxu0 0.0
    %463 = vmatprep.subr.mxu0 0.0
    %464 = vmatpush2.msra.mxu0 0.0
    %465 = vmatprep.subr.mxu0 0.0
    %466 = vmatpush2.msra.mxu0 0.0
    %467 = vmatprep.subr.mxu0 0.0
    %468 = vmatpush2.msra.mxu0 0.0
    %469 = vmatprep.subr.mxu0 0.0
    %470 = vmatpush2.msra.mxu0 0.0
    %471 = vmatprep.subr.mxu0 0.0
    %472 = vmatpush2.msra.mxu0 0.0
    %473 = vmatprep.subr.mxu0 0.0
    %474 = vmatpush2.msra.mxu0 0.0
    %475 = vmatprep.subr.mxu0 0.0
    %476 = vmatpush2.msra.mxu0 0.0
    %477 = vmatprep.subr.mxu0 0.0
    %478 = vmatpush2.msra.mxu0 0.0
    %479 = vmatprep.subr.mxu0 0.0
    %480 = vmatpush2.msra.mxu0 0.0
    %481 = vmatprep.subr.mxu0 0.0
    %482 = vmatpush2.msra.mxu0 0.0
    %483 = vmatprep.subr.mxu0 0.0
    %484 = vmatpush2.msra.mxu0 0.0
    %485 = vmatprep.subr.mxu0 0.0
    %486 = vmatpush2.msra.mxu0 0.0
    %487 = vmatprep.subr.mxu0 0.0
    %488 = vmatpush2.msra.mxu0 0.0
    %489 = vmatprep.mubr.f32.mxu0 0.0
    %490 = vmatmul.mubr.f32.gmra.mxu0 %v373
    %v491 = vpop.f32.mrf.mxu0
    %v492 = vadd.f32 0.0, %v491
    %v493 = vpop.f32.mrf.mxu0
    %v494 = vadd.f32 0.0, %v493
    %495 = vmatprep.mubr.f32.mxu0 0.0
    %496 = vmatmul.mubr.f32.gmra.mxu0 %v374
    %v497 = vpop.f32.mrf.mxu0
    %v498 = vadd.f32 0.0, %v497
    %v499 = vpop.f32.mrf.mxu0
    %v500 = vadd.f32 0.0, %v499
    %501 = vmatprep.mubr.f32.mxu0 0.0
    %502 = vmatmul.mubr.f32.gmra.mxu0 %v375
    %v503 = vpop.f32.mrf.mxu0
    %v504 = vadd.f32 0.0, %v503
    %v505 = vpop.f32.mrf.mxu0
    %v506 = vadd.f32 0.0, %v505
    %507 = vmatprep.mubr.f32.mxu0 0.0
    %508 = vmatmul.mubr.f32.gmra.mxu0 %v376
    %v509 = vpop.f32.mrf.mxu0
    %v510 = vadd.f32 0.0, %v509
    %v511 = vpop.f32.mrf.mxu0
    %v512 = vadd.f32 0.0, %v511
    %513 = vdwg.mxu0
    %514 = vmatprep.subr.mxu0 0.0
    %515 = vmatpush1.msra.mxu0 %v424
    %516 = vmatprep.subr.mxu0 0.0
    %517 = vmatpush1.msra.mxu0 %v421
    %518 = vmatprep.subr.mxu0 0.0
    %519 = vmatpush1.msra.mxu0 %v418
    %520 = vmatprep.subr.mxu0 0.0
    %521 = vmatpush1.msra.mxu0 %v415
    %522 = vmatprep.subr.mxu0 0.0
    %523 = vmatpush1.msra.mxu0 %v412
    %524 = vmatprep.subr.mxu0 0.0
    %525 = vmatpush1.msra.mxu0 %v409
    %526 = vmatprep.subr.mxu0 0.0
    %527 = vmatpush1.msra.mxu0 %v406
    %528 = vmatprep.subr.mxu0 0.0
    %529 = vmatpush1.msra.mxu0 %v403
    %530 = vmatprep.subr.mxu0 0.0
    %531 = vmatpush1.msra.mxu0 %v400
    %532 = vmatprep.subr.mxu0 0.0
    %533 = vmatpush1.msra.mxu0 %v397
    %534 = vmatprep.subr.mxu0 0.0
    %535 = vmatpush1.msra.mxu0 %v394
    %536 = vmatprep.subr.mxu0 0.0
    %537 = vmatpush1.msra.mxu0 %v391
    %538 = vmatprep.subr.mxu0 0.0
    %539 = vmatpush1.msra.mxu0 %v388
    %540 = vmatprep.subr.mxu0 0.0
    %541 = vmatpush1.msra.mxu0 %v385
    %542 = vmatprep.subr.mxu0 0.0
    %543 = vmatpush1.msra.mxu0 %v382
    %544 = vmatprep.subr.mxu0 0.0
    %545 = vmatpush1.msra.mxu0 %v379
    %546 = vmatprep.subr.mxu0 0.0
    %547 = vmatpush2.msra.mxu0 0.0
    %548 = vmatprep.subr.mxu0 0.0
    %549 = vmatpush2.msra.mxu0 0.0
    %550 = vmatprep.subr.mxu0 0.0
    %551 = vmatpush2.msra.mxu0 0.0
    %552 = vmatprep.subr.mxu0 0.0
    %553 = vmatpush2.msra.mxu0 0.0
    %554 = vmatprep.subr.mxu0 0.0
    %555 = vmatpush2.msra.mxu0 0.0
    %556 = vmatprep.subr.mxu0 0.0
    %557 = vmatpush2.msra.mxu0 0.0
    %558 = vmatprep.subr.mxu0 0.0
    %559 = vmatpush2.msra.mxu0 0.0
    %560 = vmatprep.subr.mxu0 0.0
    %561 = vmatpush2.msra.mxu0 0.0
    %562 = vmatprep.subr.mxu0 0.0
    %563 = vmatpush2.msra.mxu0 0.0
    %564 = vmatprep.subr.mxu0 0.0
    %565 = vmatpush2.msra.mxu0 0.0
    %566 = vmatprep.subr.mxu0 0.0
    %567 = vmatpush2.msra.mxu0 0.0
    %568 = vmatprep.subr.mxu0 0.0
    %569 = vmatpush2.msra.mxu0 0.0
    %570 = vmatprep.subr.mxu0 0.0
    %571 = vmatpush2.msra.mxu0 0.0
    %572 = vmatprep.subr.mxu0 0.0
    %573 = vmatpush2.msra.mxu0 0.0
    %574 = vmatprep.subr.mxu0 0.0
    %575 = vmatpush2.msra.mxu0 0.0
    %576 = vmatprep.subr.mxu0 0.0
    %577 = vmatpush2.msra.mxu0 0.0
    %578 = vmatprep.mubr.f32.mxu0 0.0
    %579 = vmatmul.mubr.f32.gmra.mxu0 %v373
    %v580 = vpop.f32.mrf.mxu0
    %v581 = vadd.f32 0.0, %v580
    %v582 = vpop.f32.mrf.mxu0
    %583 = vmatprep.mubr.f32.mxu0 0.0
    %584 = vmatmul.mubr.f32.gmra.mxu0 %v374
    %v585 = vpop.f32.mrf.mxu0
    %v586 = vadd.f32 0.0, %v585
    %v587 = vpop.f32.mrf.mxu0
    %588 = vmatprep.mubr.f32.mxu0 0.0
    %589 = vmatmul.mubr.f32.gmra.mxu0 %v375
    %v590 = vpop.f32.mrf.mxu0
    %v591 = vadd.f32 0.0, %v590
    %v592 = vpop.f32.mrf.mxu0
    %593 = vmatprep.mubr.f32.mxu0 0.0
    %594 = vmatmul.mubr.f32.gmra.mxu0 %v376
    %v595 = vpop.f32.mrf.mxu0
    %v596 = vadd.f32 0.0, %v595
    %v597 = vpop.f32.mrf.mxu0
    %598 = vdwg.mxu0
    %v599 = vld [vmem:[%s5] sm:$0xff]
    %v600 = vld [vmem:[%s5 + $0x8] sm:$0xff]
    %v601 = vld [vmem:[%s5 + $0x10] sm:$0xff]
    %v602 = vld [vmem:[%s5 + $0x18] sm:$0xff]
    %v603 = vld [vmem:[%s5 + $0x20] sm:$0xff]
    %v604 = vld [vmem:[%s5 + $0x28] sm:$0xff]
    %v605 = vld [vmem:[%s5 + $0x30] sm:$0xff]
    %v606 = vld [vmem:[%s5 + $0x38] sm:$0xff]
    %v607 = vld [vmem:[%s6] sm:$0x1]
    %v609 = vlaneseq
    %v610 = vshrl.u32 %v609, 7
    %v611 = vsub.s32 0, %v610
    %v612 = vrot.slane %v607, %v611
    %vm614 = vcmask 785408
    %v616 = vsel %vm614, %v599, 0
    %v619 = vsel %vm614, %v600, 0
    %v622 = vsel %vm614, %v601, 0
    %v625 = vsel %vm614, %v602, 0
    %v628 = vsel %vm614, %v603, 0
    %v631 = vsel %vm614, %v604, 0
    %v634 = vsel %vm614, %v605, 0
    %v637 = vsel %vm614, %v606, 0
    %639 = vmatprep.subr.mxu0 0.0
    %640 = vmatpush1.msra.mxu0 0.0
    %641 = vmatprep.subr.mxu0 0.0
    %642 = vmatpush1.msra.mxu0 0.0
    %643 = vmatprep.subr.mxu0 0.0
    %644 = vmatpush1.msra.mxu0 0.0
    %645 = vmatprep.subr.mxu0 0.0
    %646 = vmatpush1.msra.mxu0 0.0
    %647 = vmatprep.subr.mxu0 0.0
    %648 = vmatpush1.msra.mxu0 %v596
    %649 = vmatprep.subr.mxu0 0.0
    %650 = vmatpush1.msra.mxu0 %v591
    %651 = vmatprep.subr.mxu0 0.0
    %652 = vmatpush1.msra.mxu0 %v586
    %653 = vmatprep.subr.mxu0 0.0
    %654 = vmatpush1.msra.mxu0 %v581
    %655 = vmatprep.subr.mxu0 0.0
    %656 = vmatpush1.msra.mxu0 %v512
    %657 = vmatprep.subr.mxu0 0.0
    %658 = vmatpush1.msra.mxu0 %v506
    %659 = vmatprep.subr.mxu0 0.0
    %660 = vmatpush1.msra.mxu0 %v500
    %661 = vmatprep.subr.mxu0 0.0
    %662 = vmatpush1.msra.mxu0 %v494
    %663 = vmatprep.subr.mxu0 0.0
    %664 = vmatpush1.msra.mxu0 %v510
    %665 = vmatprep.subr.mxu0 0.0
    %666 = vmatpush1.msra.mxu0 %v504
    %667 = vmatprep.subr.mxu0 0.0
    %668 = vmatpush1.msra.mxu0 %v498
    %669 = vmatprep.subr.mxu0 0.0
    %670 = vmatpush1.msra.mxu0 %v492
    %671 = vmatprep.subr.mxu0 0.0
    %672 = vmatpush2.msra.mxu0 0.0
    %673 = vmatprep.subr.mxu0 0.0
    %674 = vmatpush2.msra.mxu0 0.0
    %675 = vmatprep.subr.mxu0 0.0
    %676 = vmatpush2.msra.mxu0 0.0
    %677 = vmatprep.subr.mxu0 0.0
    %678 = vmatpush2.msra.mxu0 0.0
    %679 = vmatprep.subr.mxu0 0.0
    %680 = vmatpush2.msra.mxu0 0.0
    %681 = vmatprep.subr.mxu0 0.0
    %682 = vmatpush2.msra.mxu0 0.0
    %683 = vmatprep.subr.mxu0 0.0
    %684 = vmatpush2.msra.mxu0 0.0
    %685 = vmatprep.subr.mxu0 0.0
    %686 = vmatpush2.msra.mxu0 0.0
    %687 = vmatprep.subr.mxu0 0.0
    %688 = vmatpush2.msra.mxu0 0.0
    %689 = vmatprep.subr.mxu0 0.0
    %690 = vmatpush2.msra.mxu0 0.0
    %691 = vmatprep.subr.mxu0 0.0
    %692 = vmatpush2.msra.mxu0 0.0
    %693 = vmatprep.subr.mxu0 0.0
    %694 = vmatpush2.msra.mxu0 0.0
    %695 = vmatprep.subr.mxu0 0.0
    %696 = vmatpush2.msra.mxu0 0.0
    %697 = vmatprep.subr.mxu0 0.0
    %698 = vmatpush2.msra.mxu0 0.0
    %699 = vmatprep.subr.mxu0 0.0
    %700 = vmatpush2.msra.mxu0 0.0
    %701 = vmatprep.subr.mxu0 0.0
    %702 = vmatpush2.msra.mxu0 0.0
    %703 = vmatprep.mubr.f32.mxu0 0.0
    %704 = vmatmul.mubr.f32.gmra.mxu0 %v616
    %v705 = vpop.f32.mrf.mxu0
    %v706 = vadd.f32 %v612, %v705
    %v707 = vpop.f32.mrf.mxu0
    %708 = vmatprep.mubr.f32.mxu0 0.0
    %709 = vmatmul.mubr.f32.gmra.mxu0 %v619
    %v710 = vpop.f32.mrf.mxu0
    %v711 = vadd.f32 %v612, %v710
    %v712 = vpop.f32.mrf.mxu0
    %713 = vmatprep.mubr.f32.mxu0 0.0
    %714 = vmatmul.mubr.f32.gmra.mxu0 %v622
    %v715 = vpop.f32.mrf.mxu0
    %v716 = vadd.f32 %v612, %v715
    %v717 = vpop.f32.mrf.mxu0
    %718 = vmatprep.mubr.f32.mxu0 0.0
    %719 = vmatmul.mubr.f32.gmra.mxu0 %v625
    %v720 = vpop.f32.mrf.mxu0
    %v721 = vadd.f32 %v612, %v720
    %v722 = vpop.f32.mrf.mxu0
    %723 = vmatprep.mubr.f32.mxu0 0.0
    %724 = vmatmul.mubr.f32.gmra.mxu0 %v628
    %v725 = vpop.f32.mrf.mxu0
    %v726 = vadd.f32 %v612, %v725
    %v727 = vpop.f32.mrf.mxu0
    %728 = vmatprep.mubr.f32.mxu0 0.0
    %729 = vmatmul.mubr.f32.gmra.mxu0 %v631
    %v730 = vpop.f32.mrf.mxu0
    %v731 = vadd.f32 %v612, %v730
    %v732 = vpop.f32.mrf.mxu0
    %733 = vmatprep.mubr.f32.mxu0 0.0
    %734 = vmatmul.mubr.f32.gmra.mxu0 %v634
    %v735 = vpop.f32.mrf.mxu0
    %v736 = vadd.f32 %v612, %v735
    %v737 = vpop.f32.mrf.mxu0
    %738 = vmatprep.mubr.f32.mxu0 0.0
    %739 = vmatmul.mubr.f32.gmra.mxu0 %v637
    %v740 = vpop.f32.mrf.mxu0
    %v741 = vadd.f32 %v612, %v740
    %v742 = vpop.f32.mrf.mxu0
    %743 = vdwg.mxu0
    %v744 = vmax.f32 %v706, 0.0
    %v745 = vmax.f32 %v711, 0.0
    %v746 = vmax.f32 %v716, 0.0
    %v747 = vmax.f32 %v721, 0.0
    %v748 = vmax.f32 %v726, 0.0
    %v749 = vmax.f32 %v731, 0.0
    %v750 = vmax.f32 %v736, 0.0
    %v751 = vmax.f32 %v741, 0.0
    %v752 = vld [vmem:[%s7] sm:$0xff]
    %v753 = vld [vmem:[%s7 + $0x8] sm:$0xff]
    %v754 = vld [vmem:[%s7 + $0x10] sm:$0xff]
    %v755 = vld [vmem:[%s7 + $0x18] sm:$0xff]
    %v756 = vld [vmem:[%s7 + $0x20] sm:$0xff]
    %v757 = vld [vmem:[%s7 + $0x28] sm:$0xff]
    %v758 = vld [vmem:[%s7 + $0x30] sm:$0xff]
    %v759 = vld [vmem:[%s7 + $0x38] sm:$0xff]
    %v760 = vld [vmem:[%s7 + $0x40] sm:$0xff]
    %v761 = vld [vmem:[%s7 + $0x48] sm:$0xff]
    %v762 = vld [vmem:[%s7 + $0x50] sm:$0xff]
    %v763 = vld [vmem:[%s7 + $0x58] sm:$0xff]
    %v764 = vld [vmem:[%s7 + $0x60] sm:$0xff]
    %v765 = vld [vmem:[%s7 + $0x68] sm:$0xff]
    %v766 = vld [vmem:[%s7 + $0x70] sm:$0xff]
    %v767 = vld [vmem:[%s7 + $0x78] sm:$0xff]
    %v768 = vld [vmem:[%s7 + $0x80] sm:$0xff]
    %v769 = vld [vmem:[%s7 + $0x88] sm:$0xff]
    %v770 = vld [vmem:[%s7 + $0x90] sm:$0xff]
    %v771 = vld [vmem:[%s7 + $0x98] sm:$0xff]
    %v772 = vld [vmem:[%s7 + $0xa0] sm:$0xff]
    %v773 = vld [vmem:[%s7 + $0xa8] sm:$0xff]
    %v774 = vld [vmem:[%s7 + $0xb0] sm:$0xff]
    %v775 = vld [vmem:[%s7 + $0xb8] sm:$0xff]
    %v776 = vld [vmem:[%s7 + $0xc0] sm:$0xff]
    %v777 = vld [vmem:[%s7 + $0xc8] sm:$0xff]
    %v778 = vld [vmem:[%s7 + $0xd0] sm:$0xff]
    %v779 = vld [vmem:[%s7 + $0xd8] sm:$0xff]
    %v780 = vld [vmem:[%s7 + $0xe0] sm:$0xff]
    %v781 = vld [vmem:[%s7 + $0xe8] sm:$0xff]
    %v782 = vld [vmem:[%s7 + $0xf0] sm:$0xff]
    %v783 = vld [vmem:[%s7 + $0xf8] sm:$0xff]
    %784 = vmatprep.subr.mxu0 %v783
    %785 = vmatpush1.msra.mxu0 %v782
    %786 = vmatprep.subr.mxu0 %v781
    %787 = vmatpush1.msra.mxu0 %v780
    %788 = vmatprep.subr.mxu0 %v779
    %789 = vmatpush1.msra.mxu0 %v778
    %790 = vmatprep.subr.mxu0 %v777
    %791 = vmatpush1.msra.mxu0 %v776
    %792 = vmatprep.subr.mxu0 %v775
    %793 = vmatpush1.msra.mxu0 %v774
    %794 = vmatprep.subr.mxu0 %v773
    %795 = vmatpush1.msra.mxu0 %v772
    %796 = vmatprep.subr.mxu0 %v771
    %797 = vmatpush1.msra.mxu0 %v770
    %798 = vmatprep.subr.mxu0 %v769
    %799 = vmatpush1.msra.mxu0 %v768
    %800 = vmatprep.subr.mxu0 %v767
    %801 = vmatpush1.msra.mxu0 %v766
    %802 = vmatprep.subr.mxu0 %v765
    %803 = vmatpush1.msra.mxu0 %v764
    %804 = vmatprep.subr.mxu0 %v763
    %805 = vmatpush1.msra.mxu0 %v762
    %806 = vmatprep.subr.mxu0 %v761
    %807 = vmatpush1.msra.mxu0 %v760
    %808 = vmatprep.subr.mxu0 %v759
    %809 = vmatpush1.msra.mxu0 %v758
    %810 = vmatprep.subr.mxu0 %v757
    %811 = vmatpush1.msra.mxu0 %v756
    %812 = vmatprep.subr.mxu0 %v755
    %813 = vmatpush1.msra.mxu0 %v754
    %814 = vmatprep.subr.mxu0 %v753
    %815 = vmatpush1.msra.mxu0 %v752
    %816 = vmatprep.subr.mxu0 0.0
    %817 = vmatpush2.msra.mxu0 0.0
    %818 = vmatprep.subr.mxu0 0.0
    %819 = vmatpush2.msra.mxu0 0.0
    %820 = vmatprep.subr.mxu0 0.0
    %821 = vmatpush2.msra.mxu0 0.0
    %822 = vmatprep.subr.mxu0 0.0
    %823 = vmatpush2.msra.mxu0 0.0
    %824 = vmatprep.subr.mxu0 0.0
    %825 = vmatpush2.msra.mxu0 0.0
    %826 = vmatprep.subr.mxu0 0.0
    %827 = vmatpush2.msra.mxu0 0.0
    %828 = vmatprep.subr.mxu0 0.0
    %829 = vmatpush2.msra.mxu0 0.0
    %830 = vmatprep.subr.mxu0 0.0
    %831 = vmatpush2.msra.mxu0 0.0
    %832 = vmatprep.subr.mxu0 0.0
    %833 = vmatpush2.msra.mxu0 0.0
    %834 = vmatprep.subr.mxu0 0.0
    %835 = vmatpush2.msra.mxu0 0.0
    %836 = vmatprep.subr.mxu0 0.0
    %837 = vmatpush2.msra.mxu0 0.0
    %838 = vmatprep.subr.mxu0 0.0
    %839 = vmatpush2.msra.mxu0 0.0
    %840 = vmatprep.subr.mxu0 0.0
    %841 = vmatpush2.msra.mxu0 0.0
    %842 = vmatprep.subr.mxu0 0.0
    %843 = vmatpush2.msra.mxu0 0.0
    %844 = vmatprep.subr.mxu0 0.0
    %845 = vmatpush2.msra.mxu0 0.0
    %846 = vmatprep.subr.mxu0 0.0
    %847 = vmatpush2.msra.mxu0 0.0
    %848 = vmatprep.mubr.f32.mxu0 0.0
    %849 = vmatmul.mubr.f32.gmra.mxu0 %v744
    %v850 = vpop.f32.mrf.mxu0
    %v851 = vadd.f32 0.0, %v850
    %v852 = vpop.f32.mrf.mxu0
    %v853 = vadd.f32 0.0, %v852
    %854 = vmatprep.mubr.f32.mxu0 0.0
    %855 = vmatmul.mubr.f32.gmra.mxu0 %v745
    %v856 = vpop.f32.mrf.mxu0
    %v857 = vadd.f32 0.0, %v856
    %v858 = vpop.f32.mrf.mxu0
    %v859 = vadd.f32 0.0, %v858
    %860 = vmatprep.mubr.f32.mxu0 0.0
    %861 = vmatmul.mubr.f32.gmra.mxu0 %v746
    %v862 = vpop.f32.mrf.mxu0
    %v863 = vadd.f32 0.0, %v862
    %v864 = vpop.f32.mrf.mxu0
    %v865 = vadd.f32 0.0, %v864
    %866 = vmatprep.mubr.f32.mxu0 0.0
    %867 = vmatmul.mubr.f32.gmra.mxu0 %v747
    %v868 = vpop.f32.mrf.mxu0
    %v869 = vadd.f32 0.0, %v868
    %v870 = vpop.f32.mrf.mxu0
    %v871 = vadd.f32 0.0, %v870
    %872 = vmatprep.mubr.f32.mxu0 0.0
    %873 = vmatmul.mubr.f32.gmra.mxu0 %v748
    %v874 = vpop.f32.mrf.mxu0
    %v875 = vadd.f32 0.0, %v874
    %v876 = vpop.f32.mrf.mxu0
    %v877 = vadd.f32 0.0, %v876
    %878 = vmatprep.mubr.f32.mxu0 0.0
    %879 = vmatmul.mubr.f32.gmra.mxu0 %v749
    %v880 = vpop.f32.mrf.mxu0
    %v881 = vadd.f32 0.0, %v880
    %v882 = vpop.f32.mrf.mxu0
    %v883 = vadd.f32 0.0, %v882
    %884 = vmatprep.mubr.f32.mxu0 0.0
    %885 = vmatmul.mubr.f32.gmra.mxu0 %v750
    %v886 = vpop.f32.mrf.mxu0
    %v887 = vadd.f32 0.0, %v886
    %v888 = vpop.f32.mrf.mxu0
    %v889 = vadd.f32 0.0, %v888
    %890 = vmatprep.mubr.f32.mxu0 0.0
    %891 = vmatmul.mubr.f32.gmra.mxu0 %v751
    %v892 = vpop.f32.mrf.mxu0
    %v893 = vadd.f32 0.0, %v892
    %v894 = vpop.f32.mrf.mxu0
    %v895 = vadd.f32 0.0, %v894
    %896 = vdwg.mxu0
    %905 = vrot.lane.b32.xlu0 %v851, 64
    %v906 = vpop.permute.xlu0 %905
    %907 = vrot.lane.b32.xlu0 %v857, 64
    %v908 = vpop.permute.xlu0 %907
    %909 = vrot.lane.b32.xlu0 %v863, 64
    %v910 = vpop.permute.xlu0 %909
    %911 = vrot.lane.b32.xlu0 %v869, 64
    %v912 = vpop.permute.xlu0 %911
    %913 = vrot.lane.b32.xlu0 %v875, 64
    %v914 = vpop.permute.xlu0 %913
    %915 = vrot.lane.b32.xlu0 %v881, 64
    %v916 = vpop.permute.xlu0 %915
    %917 = vrot.lane.b32.xlu0 %v887, 64
    %v918 = vpop.permute.xlu0 %917
    %919 = vrot.lane.b32.xlu0 %v893, 64
    %v920 = vpop.permute.xlu0 %919
    %v929 = vld [vmem:[#allocation4] sm:$0xff]
    %v930 = vld [vmem:[#allocation4 + $0x8] sm:$0xff]
    %v931 = vld [vmem:[#allocation4 + $0x10] sm:$0xff]
    %v932 = vld [vmem:[#allocation4 + $0x18] sm:$0xff]
    %v933 = vld [vmem:[#allocation4 + $0x20] sm:$0xff]
    %v934 = vld [vmem:[#allocation4 + $0x28] sm:$0xff]
    %v935 = vld [vmem:[#allocation4 + $0x30] sm:$0xff]
    %v936 = vld [vmem:[#allocation4 + $0x38] sm:$0xff]
    %v937 = vld [vmem:[#allocation4 + $0x40] sm:$0xff]
    %v938 = vld [vmem:[#allocation4 + $0x48] sm:$0xff]
    %v939 = vld [vmem:[#allocation4 + $0x50] sm:$0xff]
    %v940 = vld [vmem:[#allocation4 + $0x58] sm:$0xff]
    %v941 = vld [vmem:[#allocation4 + $0x60] sm:$0xff]
    %v942 = vld [vmem:[#allocation4 + $0x68] sm:$0xff]
    %v943 = vld [vmem:[#allocation4 + $0x70] sm:$0xff]
    %v944 = vld [vmem:[#allocation4 + $0x78] sm:$0xff]
    %v946 = vsel %vm105, %v930, 0
    %v949 = vsel %vm105, %v932, 0
    %v952 = vsel %vm105, %v934, 0
    %v955 = vsel %vm105, %v936, 0
    %v958 = vsel %vm105, %v938, 0
    %v961 = vsel %vm105, %v940, 0
    %v964 = vsel %vm105, %v942, 0
    %v967 = vsel %vm105, %v944, 0
    %969 = vmatprep.subr.mxu0 0.0
    %970 = vmatpush1.msra.mxu0 %v920
    %971 = vmatprep.subr.mxu0 0.0
    %972 = vmatpush1.msra.mxu0 %v918
    %973 = vmatprep.subr.mxu0 0.0
    %974 = vmatpush1.msra.mxu0 %v916
    %975 = vmatprep.subr.mxu0 0.0
    %976 = vmatpush1.msra.mxu0 %v914
    %977 = vmatprep.subr.mxu0 0.0
    %978 = vmatpush1.msra.mxu0 %v912
    %979 = vmatprep.subr.mxu0 0.0
    %980 = vmatpush1.msra.mxu0 %v910
    %981 = vmatprep.subr.mxu0 0.0
    %982 = vmatpush1.msra.mxu0 %v908
    %983 = vmatprep.subr.mxu0 0.0
    %984 = vmatpush1.msra.mxu0 %v906
    %985 = vmatprep.subr.mxu0 0.0
    %986 = vmatpush1.msra.mxu0 %v893
    %987 = vmatprep.subr.mxu0 0.0
    %988 = vmatpush1.msra.mxu0 %v887
    %989 = vmatprep.subr.mxu0 0.0
    %990 = vmatpush1.msra.mxu0 %v881
    %991 = vmatprep.subr.mxu0 0.0
    %992 = vmatpush1.msra.mxu0 %v875
    %993 = vmatprep.subr.mxu0 0.0
    %994 = vmatpush1.msra.mxu0 %v869
    %995 = vmatprep.subr.mxu0 0.0
    %996 = vmatpush1.msra.mxu0 %v863
    %997 = vmatprep.subr.mxu0 0.0
    %998 = vmatpush1.msra.mxu0 %v857
    %999 = vmatprep.subr.mxu0 0.0
    %1000 = vmatpush1.msra.mxu0 %v851
    %1001 = vmatprep.subr.mxu0 0.0
    %1002 = vmatpush2.msra.mxu0 0.0
    %1003 = vmatprep.subr.mxu0 0.0
    %1004 = vmatpush2.msra.mxu0 0.0
    %1005 = vmatprep.subr.mxu0 0.0
    %1006 = vmatpush2.msra.mxu0 0.0
    %1007 = vmatprep.subr.mxu0 0.0
    %1008 = vmatpush2.msra.mxu0 0.0
    %1009 = vmatprep.subr.mxu0 0.0
    %1010 = vmatpush2.msra.mxu0 0.0
    %1011 = vmatprep.subr.mxu0 0.0
    %1012 = vmatpush2.msra.mxu0 0.0
    %1013 = vmatprep.subr.mxu0 0.0
    %1014 = vmatpush2.msra.mxu0 0.0
    %1015 = vmatprep.subr.mxu0 0.0
    %1016 = vmatpush2.msra.mxu0 0.0
    %1017 = vmatprep.subr.mxu0 0.0
    %1018 = vmatpush2.msra.mxu0 %v895
    %1019 = vmatprep.subr.mxu0 0.0
    %1020 = vmatpush2.msra.mxu0 %v889
    %1021 = vmatprep.subr.mxu0 0.0
    %1022 = vmatpush2.msra.mxu0 %v883
    %1023 = vmatprep.subr.mxu0 0.0
    %1024 = vmatpush2.msra.mxu0 %v877
    %1025 = vmatprep.subr.mxu0 0.0
    %1026 = vmatpush2.msra.mxu0 %v871
    %1027 = vmatprep.subr.mxu0 0.0
    %1028 = vmatpush2.msra.mxu0 %v865
    %1029 = vmatprep.subr.mxu0 0.0
    %1030 = vmatpush2.msra.mxu0 %v859
    %1031 = vmatprep.subr.mxu0 0.0
    %1032 = vmatpush2.msra.mxu0 %v853
    %1033 = vmatprep.mubr.f32.mxu0 %v946
    %1034 = vmatmul.mubr.f32.gmra.mxu0 %v929
    %v1035 = vpop.f32.mrf.mxu0
    %v1036 = vadd.f32 0.0, %v1035
    %v1037 = vpop.f32.mrf.mxu0
    %1038 = vmatprep.mubr.f32.mxu0 %v949
    %1039 = vmatmul.mubr.f32.gmra.mxu0 %v931
    %v1040 = vpop.f32.mrf.mxu0
    %v1041 = vadd.f32 0.0, %v1040
    %v1042 = vpop.f32.mrf.mxu0
    %1043 = vmatprep.mubr.f32.mxu0 %v952
    %1044 = vmatmul.mubr.f32.gmra.mxu0 %v933
    %v1045 = vpop.f32.mrf.mxu0
    %v1046 = vadd.f32 0.0, %v1045
    %v1047 = vpop.f32.mrf.mxu0
    %1048 = vmatprep.mubr.f32.mxu0 %v955
    %1049 = vmatmul.mubr.f32.gmra.mxu0 %v935
    %v1050 = vpop.f32.mrf.mxu0
    %v1051 = vadd.f32 0.0, %v1050
    %v1052 = vpop.f32.mrf.mxu0
    %1053 = vmatprep.mubr.f32.mxu0 %v958
    %1054 = vmatmul.mubr.f32.gmra.mxu0 %v937
    %v1055 = vpop.f32.mrf.mxu0
    %v1056 = vadd.f32 0.0, %v1055
    %v1057 = vpop.f32.mrf.mxu0
    %1058 = vmatprep.mubr.f32.mxu0 %v961
    %1059 = vmatmul.mubr.f32.gmra.mxu0 %v939
    %v1060 = vpop.f32.mrf.mxu0
    %v1061 = vadd.f32 0.0, %v1060
    %v1062 = vpop.f32.mrf.mxu0
    %1063 = vmatprep.mubr.f32.mxu0 %v964
    %1064 = vmatmul.mubr.f32.gmra.mxu0 %v941
    %v1065 = vpop.f32.mrf.mxu0
    %v1066 = vadd.f32 0.0, %v1065
    %v1067 = vpop.f32.mrf.mxu0
    %1068 = vmatprep.mubr.f32.mxu0 %v967
    %1069 = vmatmul.mubr.f32.gmra.mxu0 %v943
    %v1070 = vpop.f32.mrf.mxu0
    %v1071 = vadd.f32 0.0, %v1070
    %v1072 = vpop.f32.mrf.mxu0
    %1073 = vdwg.mxu0
    %v1074 = vld [vmem:[#allocation6] sm:$0xff]
    %v1075 = vld [vmem:[#allocation6 + $0x8] sm:$0xff]
    %v1076 = vld [vmem:[#allocation6 + $0x10] sm:$0xff]
    %v1077 = vld [vmem:[#allocation6 + $0x18] sm:$0xff]
    %v1078 = vld [vmem:[#allocation6 + $0x20] sm:$0xff]
    %v1079 = vld [vmem:[#allocation6 + $0x28] sm:$0xff]
    %v1080 = vld [vmem:[#allocation6 + $0x30] sm:$0xff]
    %v1081 = vld [vmem:[#allocation6 + $0x38] sm:$0xff]
    %v1082 = vld [vmem:[#allocation6 + $0x40] sm:$0xff]
    %v1083 = vld [vmem:[#allocation6 + $0x48] sm:$0xff]
    %v1084 = vld [vmem:[#allocation6 + $0x50] sm:$0xff]
    %v1085 = vld [vmem:[#allocation6 + $0x58] sm:$0xff]
    %v1086 = vld [vmem:[#allocation6 + $0x60] sm:$0xff]
    %v1087 = vld [vmem:[#allocation6 + $0x68] sm:$0xff]
    %v1088 = vld [vmem:[#allocation6 + $0x70] sm:$0xff]
    %v1089 = vld [vmem:[#allocation6 + $0x78] sm:$0xff]
    %v1091 = vsel %vm105, %v1075, 0
    %v1094 = vsel %vm105, %v1077, 0
    %v1097 = vsel %vm105, %v1079, 0
    %v1100 = vsel %vm105, %v1081, 0
    %v1103 = vsel %vm105, %v1083, 0
    %v1106 = vsel %vm105, %v1085, 0
    %v1109 = vsel %vm105, %v1087, 0
    %v1112 = vsel %vm105, %v1089, 0
    %1114 = vmatprep.subr.mxu0 0.0
    %1115 = vmatpush1.msra.mxu0 %v920
    %1116 = vmatprep.subr.mxu0 0.0
    %1117 = vmatpush1.msra.mxu0 %v918
    %1118 = vmatprep.subr.mxu0 0.0
    %1119 = vmatpush1.msra.mxu0 %v916
    %1120 = vmatprep.subr.mxu0 0.0
    %1121 = vmatpush1.msra.mxu0 %v914
    %1122 = vmatprep.subr.mxu0 0.0
    %1123 = vmatpush1.msra.mxu0 %v912
    %1124 = vmatprep.subr.mxu0 0.0
    %1125 = vmatpush1.msra.mxu0 %v910
    %1126 = vmatprep.subr.mxu0 0.0
    %1127 = vmatpush1.msra.mxu0 %v908
    %1128 = vmatprep.subr.mxu0 0.0
    %1129 = vmatpush1.msra.mxu0 %v906
    %1130 = vmatprep.subr.mxu0 0.0
    %1131 = vmatpush1.msra.mxu0 %v893
    %1132 = vmatprep.subr.mxu0 0.0
    %1133 = vmatpush1.msra.mxu0 %v887
    %1134 = vmatprep.subr.mxu0 0.0
    %1135 = vmatpush1.msra.mxu0 %v881
    %1136 = vmatprep.subr.mxu0 0.0
    %1137 = vmatpush1.msra.mxu0 %v875
    %1138 = vmatprep.subr.mxu0 0.0
    %1139 = vmatpush1.msra.mxu0 %v869
    %1140 = vmatprep.subr.mxu0 0.0
    %1141 = vmatpush1.msra.mxu0 %v863
    %1142 = vmatprep.subr.mxu0 0.0
    %1143 = vmatpush1.msra.mxu0 %v857
    %1144 = vmatprep.subr.mxu0 0.0
    %1145 = vmatpush1.msra.mxu0 %v851
    %1146 = vmatprep.subr.mxu0 0.0
    %1147 = vmatpush2.msra.mxu0 0.0
    %1148 = vmatprep.subr.mxu0 0.0
    %1149 = vmatpush2.msra.mxu0 0.0
    %1150 = vmatprep.subr.mxu0 0.0
    %1151 = vmatpush2.msra.mxu0 0.0
    %1152 = vmatprep.subr.mxu0 0.0
    %1153 = vmatpush2.msra.mxu0 0.0
    %1154 = vmatprep.subr.mxu0 0.0
    %1155 = vmatpush2.msra.mxu0 0.0
    %1156 = vmatprep.subr.mxu0 0.0
    %1157 = vmatpush2.msra.mxu0 0.0
    %1158 = vmatprep.subr.mxu0 0.0
    %1159 = vmatpush2.msra.mxu0 0.0
    %1160 = vmatprep.subr.mxu0 0.0
    %1161 = vmatpush2.msra.mxu0 0.0
    %1162 = vmatprep.subr.mxu0 0.0
    %1163 = vmatpush2.msra.mxu0 %v895
    %1164 = vmatprep.subr.mxu0 0.0
    %1165 = vmatpush2.msra.mxu0 %v889
    %1166 = vmatprep.subr.mxu0 0.0
    %1167 = vmatpush2.msra.mxu0 %v883
    %1168 = vmatprep.subr.mxu0 0.0
    %1169 = vmatpush2.msra.mxu0 %v877
    %1170 = vmatprep.subr.mxu0 0.0
    %1171 = vmatpush2.msra.mxu0 %v871
    %1172 = vmatprep.subr.mxu0 0.0
    %1173 = vmatpush2.msra.mxu0 %v865
    %1174 = vmatprep.subr.mxu0 0.0
    %1175 = vmatpush2.msra.mxu0 %v859
    %1176 = vmatprep.subr.mxu0 0.0
    %1177 = vmatpush2.msra.mxu0 %v853
    %1178 = vmatprep.mubr.f32.mxu0 %v1091
    %1179 = vmatmul.mubr.f32.gmra.mxu0 %v1074
    %v1180 = vpop.f32.mrf.mxu0
    %v1181 = vadd.f32 0.0, %v1180
    %v1182 = vpop.f32.mrf.mxu0
    %1183 = vmatprep.mubr.f32.mxu0 %v1094
    %1184 = vmatmul.mubr.f32.gmra.mxu0 %v1076
    %v1185 = vpop.f32.mrf.mxu0
    %v1186 = vadd.f32 0.0, %v1185
    %v1187 = vpop.f32.mrf.mxu0
    %1188 = vmatprep.mubr.f32.mxu0 %v1097
    %1189 = vmatmul.mubr.f32.gmra.mxu0 %v1078
    %v1190 = vpop.f32.mrf.mxu0
    %v1191 = vadd.f32 0.0, %v1190
    %v1192 = vpop.f32.mrf.mxu0
    %1193 = vmatprep.mubr.f32.mxu0 %v1100
    %1194 = vmatmul.mubr.f32.gmra.mxu0 %v1080
    %v1195 = vpop.f32.mrf.mxu0
    %v1196 = vadd.f32 0.0, %v1195
    %v1197 = vpop.f32.mrf.mxu0
    %1198 = vmatprep.mubr.f32.mxu0 %v1103
    %1199 = vmatmul.mubr.f32.gmra.mxu0 %v1082
    %v1200 = vpop.f32.mrf.mxu0
    %v1201 = vadd.f32 0.0, %v1200
    %v1202 = vpop.f32.mrf.mxu0
    %1203 = vmatprep.mubr.f32.mxu0 %v1106
    %1204 = vmatmul.mubr.f32.gmra.mxu0 %v1084
    %v1205 = vpop.f32.mrf.mxu0
    %v1206 = vadd.f32 0.0, %v1205
    %v1207 = vpop.f32.mrf.mxu0
    %1208 = vmatprep.mubr.f32.mxu0 %v1109
    %1209 = vmatmul.mubr.f32.gmra.mxu0 %v1086
    %v1210 = vpop.f32.mrf.mxu0
    %v1211 = vadd.f32 0.0, %v1210
    %v1212 = vpop.f32.mrf.mxu0
    %1213 = vmatprep.mubr.f32.mxu0 %v1112
    %1214 = vmatmul.mubr.f32.gmra.mxu0 %v1088
    %v1215 = vpop.f32.mrf.mxu0
    %v1216 = vadd.f32 0.0, %v1215
    %v1217 = vpop.f32.mrf.mxu0
    %1218 = vdwg.mxu0
    %1227 = vrot.lane.b32.xlu0 %v1181, 64
    %v1228 = vpop.permute.xlu0 %1227
    %1229 = vrot.lane.b32.xlu0 %v1186, 64
    %v1230 = vpop.permute.xlu0 %1229
    %1231 = vrot.lane.b32.xlu0 %v1191, 64
    %v1232 = vpop.permute.xlu0 %1231
    %1233 = vrot.lane.b32.xlu0 %v1196, 64
    %v1234 = vpop.permute.xlu0 %1233
    %1235 = vrot.lane.b32.xlu0 %v1201, 64
    %v1236 = vpop.permute.xlu0 %1235
    %1237 = vrot.lane.b32.xlu0 %v1206, 64
    %v1238 = vpop.permute.xlu0 %1237
    %1239 = vrot.lane.b32.xlu0 %v1211, 64
    %v1240 = vpop.permute.xlu0 %1239
    %1241 = vrot.lane.b32.xlu0 %v1216, 64
    %v1242 = vpop.permute.xlu0 %1241
    %v1251 = vsel %vm105, %v1036, %v1228
    %v1252 = vsel %vm105, %v1041, %v1230
    %v1253 = vsel %vm105, %v1046, %v1232
    %v1254 = vsel %vm105, %v1051, %v1234
    %v1255 = vsel %vm105, %v1056, %v1236
    %v1256 = vsel %vm105, %v1061, %v1238
    %v1257 = vsel %vm105, %v1066, %v1240
    %v1258 = vsel %vm105, %v1071, %v1242
    %v1259 = vld [vmem:[%s10] sm:$0x1]
    %v1261 = vlaneseq
    %v1262 = vshrl.u32 %v1261, 7
    %v1263 = vsub.s32 0, %v1262
    %v1264 = vrot.slane %v1259, %v1263
    %v1266 = vadd.f32 %v1251, %v1264
    %v1267 = vadd.f32 %v1252, %v1264
    %v1268 = vadd.f32 %v1253, %v1264
    %v1269 = vadd.f32 %v1254, %v1264
    %v1270 = vadd.f32 %v1255, %v1264
    %v1271 = vadd.f32 %v1256, %v1264
    %v1272 = vadd.f32 %v1257, %v1264
    %v1273 = vadd.f32 %v1258, %v1264
    %v1274 = vxor.u32 %v1266, 2147483648
    %v1275 = vxor.u32 %v1267, 2147483648
    %v1276 = vxor.u32 %v1268, 2147483648
    %v1277 = vxor.u32 %v1269, 2147483648
    %v1278 = vxor.u32 %v1270, 2147483648
    %v1279 = vxor.u32 %v1271, 2147483648
    %v1280 = vxor.u32 %v1272, 2147483648
    %v1281 = vxor.u32 %v1273, 2147483648
    %v1282 = vmul.f32 %v1274, 1.442695
    %v1283 = vpow.pop %v1282
    %v1284 = vmul.f32 %v1275, 1.442695
    %v1285 = vpow.pop %v1284
    %v1286 = vmul.f32 %v1276, 1.442695
    %v1287 = vpow.pop %v1286
    %v1288 = vmul.f32 %v1277, 1.442695
    %v1289 = vpow.pop %v1288
    %v1290 = vmul.f32 %v1278, 1.442695
    %v1291 = vpow.pop %v1290
    %v1292 = vmul.f32 %v1279, 1.442695
    %v1293 = vpow.pop %v1292
    %v1294 = vmul.f32 %v1280, 1.442695
    %v1295 = vpow.pop %v1294
    %v1296 = vmul.f32 %v1281, 1.442695
    %v1297 = vpow.pop %v1296
    %v1298 = vadd.f32 %v1283, 1.0
    %v1299 = vadd.f32 %v1285, 1.0
    %v1300 = vadd.f32 %v1287, 1.0
    %v1301 = vadd.f32 %v1289, 1.0
    %v1302 = vadd.f32 %v1291, 1.0
    %v1303 = vadd.f32 %v1293, 1.0
    %v1304 = vadd.f32 %v1295, 1.0
    %v1305 = vadd.f32 %v1297, 1.0
    %v1306 = vrcp.pop %v1298
    %v1307 = vmul.f32 1.0, %v1306
    %v1308 = vrcp.pop %v1299
    %v1309 = vmul.f32 1.0, %v1308
    %v1310 = vrcp.pop %v1300
    %v1311 = vmul.f32 1.0, %v1310
    %v1312 = vrcp.pop %v1301
    %v1313 = vmul.f32 1.0, %v1312
    %v1314 = vrcp.pop %v1302
    %v1315 = vmul.f32 1.0, %v1314
    %v1316 = vrcp.pop %v1303
    %v1317 = vmul.f32 1.0, %v1316
    %v1318 = vrcp.pop %v1304
    %v1319 = vmul.f32 1.0, %v1318
    %v1320 = vrcp.pop %v1305
    %v1321 = vmul.f32 1.0, %v1320
    %1322 = vst [vmem:[%s11] sm:$0xff] %v1307
    %1323 = vst [vmem:[%s11 + $0x8] sm:$0xff] %v1309
    %1324 = vst [vmem:[%s11 + $0x10] sm:$0xff] %v1311
    %1325 = vst [vmem:[%s11 + $0x18] sm:$0xff] %v1313
    %1326 = vst [vmem:[%s11 + $0x20] sm:$0xff] %v1315
    %1327 = vst [vmem:[%s11 + $0x28] sm:$0xff] %v1317
    %1328 = vst [vmem:[%s11 + $0x30] sm:$0xff] %v1319
    %1329 = vst [vmem:[%s11 + $0x38] sm:$0xff] %v1321
    // Predicated region
    $region58: #{forward.1} parent=1 // pred_check
      _
    $region59: #{forward.1} parent=1 // pred_check_branch
      %1331 = sbr.rel (0) target = $region61
    $region60: #{forward.1} parent=1 // pred_region
      _
    $region61: #{forward.1} parent=1 // pred_fallthru
      _
    // Predicated region
    $region62: #{forward.1} parent=1 // pred_check
      _
    $region63: #{forward.1} parent=1 // pred_check_branch
      %1333 = sbr.rel (0) target = $region65
    $region64: #{forward.1} parent=1 // pred_region
      _
    $region65: #{forward.1} parent=1 // pred_fallthru
      _
    %1334 = vsyncpa [#allocation3], 1
    %1335 = vsyncpa [#allocation5], 1

</llo_original>
